<compile_context>
chip_gen: v6e
topology: v6e:2x2x1
jax: 0.10.0
libtpu: 0.0.40
codegen_flags: <defaults>
</compile_context>

<pallas_src>
import functools

import jax
import jax.numpy as jnp
from jax.experimental import pallas as pl
from jax.experimental.pallas import tpu as pltpu


def _round_up(x, m):
    return (x + m - 1) // m * m


def _conv_stats_kernel(x_ref, w_ref, conv_ref, stats_ref, *,
                       KH, KW, Ho, Wo, stride, cout):
    """Per image tile: conv as one [M, KH*KW*Cin] x [KH*KW*Cin, Cout_pad] matmul,
    plus per-tile mean / M2 (sum of squared deviations) BatchNorm statistics."""
    cin = x_ref.shape[-1]
    m = Ho * Wo

    # im2col built in VMEM from ref slices (no HBM blow-up, no value-slice relayouts
    # of a pre-loaded tile). Concat order (kh, kw, cin) matches the weight layout.
    cols = []
    for kh in range(KH):
        for kw in range(KW):
            if stride == 1:
                cols.append(x_ref[0, kh:kh + Ho, kw:kw + Wo, :])
            else:
                # TODO(synk): strided ref slices; value-slice fallback for stride > 1.
                cols.append(x_ref[0][kh:kh + (Ho - 1) * stride + 1:stride,
                                     kw:kw + (Wo - 1) * stride + 1:stride, :])
    patch = jnp.concatenate(cols, axis=-1).reshape(m, KH * KW * cin)

    acc = jnp.dot(patch, w_ref[...], preferred_element_type=jnp.float32)  # (m, Cout_pad)

    # Stash the pre-BN conv result (only the real Cout columns reach HBM).
    # TODO(synk): for bf16 networks store this stash in bf16 to halve its HBM traffic.
    conv_ref[0] = acc[:, :cout]

    # Per-tile mean + mean-shifted M2 (numerically robust; combined outside).
    mean_t = jnp.sum(acc, axis=0, keepdims=True) * (1.0 / m)        # (1, Cout_pad)
    d = acc - mean_t
    m2_t = jnp.sum(d * d, axis=0, keepdims=True)                    # (1, Cout_pad)
    stats_ref[0] = jnp.concatenate([mean_t[:, :cout], m2_t[:, :cout]], axis=0)


def _bn_relu_kernel(conv_ref, scale_ref, shift_ref, o_ref):
    y = conv_ref[0] * scale_ref[...] + shift_ref[...]
    o_ref[0] = jnp.maximum(y, 0.0).astype(o_ref.dtype)


def conv_block_mn(x_nchw, weight_oihw, gamma, beta, *, stride=1, padding=1,
                  groups=1, eps=1e-5, out_dtype=jnp.bfloat16):
    """Forward pass of ConvBlock_MN (PyTorch NCHW input / OIHW weight conventions)."""
    assert groups == 1  # TODO(synk): grouped convolution (groups > 1) not implemented.
    N, Cin, H, W = x_nchw.shape
    Cout, Cin_w, KH, KW = weight_oihw.shape
    assert Cin_w == Cin

    Ho = (H + 2 * padding - KH) // stride + 1
    Wo = (W + 2 * padding - KW) // stride + 1
    Hp, Wp = H + 2 * padding, W + 2 * padding
    Cout_pad = _round_up(Cout, 128)   # MXU lane padding only; never written to HBM.

    # TODO(synk): keep activations NHWC across the whole network so these wrapper
    # transposes (full-array HBM round trips) disappear; the zero-padding could also
    # be folded into the kernel via a halo index_map.
    x = jnp.transpose(x_nchw, (0, 2, 3, 1))
    xp = jnp.pad(x, ((0, 0), (padding, padding), (padding, padding), (0, 0)))
    xp = xp.astype(jnp.bfloat16)

    # OIHW -> (KH*KW*Cin, Cout_pad); contraction order (kh, kw, cin) matches the
    # in-kernel im2col concat order. Padded output columns are zero weights.
    w = jnp.transpose(weight_oihw, (2, 3, 1, 0)).reshape(KH * KW * Cin, Cout)
    w = jnp.pad(w, ((0, 0), (0, Cout_pad - Cout))).astype(jnp.bfloat16)

    kernel1 = functools.partial(_conv_stats_kernel, KH=KH, KW=KW, Ho=Ho, Wo=Wo,
                                stride=stride, cout=Cout)

    # TODO(synk): for very large spatial dims (per-image tile exceeding the VMEM
    # budget, esp. on v7x's 64 MiB) add an h-tiled variant with a 2-row halo DMA.
    conv, stats = pl.pallas_call(
        kernel1,
        out_shape=(jax.ShapeDtypeStruct((N, Ho * Wo, Cout), jnp.float32),
                   jax.ShapeDtypeStruct((N, 2, Cout), jnp.float32)),
        grid=(N,),
        in_specs=[
            pl.BlockSpec((1, Hp, Wp, Cin), lambda j: (j, 0, 0, 0)),
            pl.BlockSpec((KH * KW * Cin, Cout_pad), lambda j: (0, 0)),
        ],
        out_specs=(pl.BlockSpec((1, Ho * Wo, Cout), lambda j: (j, 0, 0)),
                   pl.BlockSpec((1, 2, Cout), lambda j: (j, 0, 0))),
        compiler_params=pltpu.CompilerParams(
            dimension_semantics=("parallel",),
            vmem_limit_bytes=64 * 1024 * 1024),
    )(xp, w)

    # Tiny O(Cout) BN fold (Chan's combine of per-tile mean/M2) in plain JAX.
    m_tile = Ho * Wo
    tile_mean = stats[:, 0, :]                       # (N, Cout)
    tile_m2 = stats[:, 1, :]                         # (N, Cout)
    mean = jnp.mean(tile_mean, axis=0)               # (Cout,)
    var = (jnp.sum(tile_m2, axis=0)
           + m_tile * jnp.sum((tile_mean - mean[None, :]) ** 2, axis=0)) / (N * m_tile)
    inv_std = jax.lax.rsqrt(var + eps)
    g32 = gamma.astype(jnp.float32)
    scale = (g32 * inv_std).reshape(1, Cout)
    shift = (beta.astype(jnp.float32) - mean * g32 * inv_std).reshape(1, Cout)

    out = pl.pallas_call(
        _bn_relu_kernel,
        out_shape=jax.ShapeDtypeStruct((N, Ho * Wo, Cout), out_dtype),
        grid=(N,),
        in_specs=[
            pl.BlockSpec((1, Ho * Wo, Cout), lambda j: (j, 0, 0)),
            pl.BlockSpec((1, Cout), lambda j: (0, 0)),
            pl.BlockSpec((1, Cout), lambda j: (0, 0)),
        ],
        out_specs=pl.BlockSpec((1, Ho * Wo, Cout), lambda j: (j, 0, 0)),
        compiler_params=pltpu.CompilerParams(
            dimension_semantics=("parallel",),
            vmem_limit_bytes=64 * 1024 * 1024),
    )(conv, scale, shift)

    out = out.reshape(N, Ho, Wo, Cout)
    return jnp.transpose(out, (0, 3, 1, 2))


def _reference(x_nchw, weight_oihw, gamma, beta, *, stride, padding, eps=1e-5):
    """Pure-JAX reference mirroring PyTorch train-mode Conv+BN+ReLU.

    Matmul operands are rounded to bf16 (same as the kernel) so the comparison
    isolates kernel correctness from input quantization."""
    xq = x_nchw.astype(jnp.bfloat16).astype(jnp.float32)
    wq = weight_oihw.astype(jnp.bfloat16).astype(jnp.float32)
    y = jax.lax.conv_general_dilated(
        xq, wq, window_strides=(stride, stride),
        padding=((padding, padding), (padding, padding)),
        dimension_numbers=("NCHW", "OIHW", "NCHW"),
        precision=jax.lax.Precision.HIGHEST)
    mean = y.mean(axis=(0, 2, 3), keepdims=True)
    var = ((y - mean) ** 2).mean(axis=(0, 2, 3), keepdims=True)
    yn = (y - mean) * jax.lax.rsqrt(var + eps)
    yn = yn * gamma.reshape(1, -1, 1, 1) + beta.reshape(1, -1, 1, 1)
    return jnp.maximum(yn, 0.0)


if __name__ == "__main__":
    key = jax.random.PRNGKey(0)
    k_w, k_x = jax.random.split(key)

    # Small shapes consistent with the module: NCHW input, 3x3 conv, stride 1, padding 1.
    N, Cin, H, W = 2, 4, 16, 16
    Cout, KH, KW = 8, 3, 3
    stride, padding = 1, 1

    # kaiming_normal_-like init; BN defaults gamma=1, beta=0.
    fan_in = Cin * KH * KW
    weight = jax.random.normal(k_w, (Cout, Cin, KH, KW), jnp.float32) * jnp.sqrt(2.0 / fan_in)
    gamma = jnp.ones((Cout,), jnp.float32)
    beta = jnp.zeros((Cout,), jnp.float32)

    x = jax.random.normal(k_x, (N, Cin, H, W), jnp.float32)

    out = conv_block_mn(x, weight, gamma, beta, stride=stride, padding=padding)
    out = jax.block_until_ready(out)

    ref = _reference(x, weight, gamma, beta, stride=stride, padding=padding)
    assert out.shape == ref.shape == (N, Cout, H, W), (out.shape, ref.shape)
    # Tolerance covers the bf16 rounding of the final stored activation.
    max_err = float(jnp.max(jnp.abs(out.astype(jnp.float32) - ref)))
    assert max_err < 2e-2, f"max abs error {max_err}"

    print("KERNEL_OK")
</pallas_src>

<mosaic_0001>
module attributes {stable_mosaic.version = 11 : i64} {
  func.func @_conv_stats_kernel(%arg0: i32, %arg1: memref<1x18x18x4xbf16, #tpu.memory_space<vmem>>, %arg2: memref<36x128xbf16, #tpu.memory_space<vmem>>, %arg3: memref<1x256x8xf32, #tpu.memory_space<vmem>>, %arg4: memref<1x2x8xf32, #tpu.memory_space<vmem>>) attributes {dimension_semantics = [#tpu.dimension_semantics<parallel>], iteration_bounds = array<i64: 2>, scalar_prefetch = 0 : i64, scratch_operands = 0 : i64, tpu.core_type = #tpu.core_type<tc>, window_params = [{transform_indices = @transform_0, window_bounds = array<i64: 1, 18, 18, 4>}, {pipeline_mode = #tpu.pipeline_mode<synchronous>, transform_indices = @transform_1, window_bounds = array<i64: 36, 128>}, {transform_indices = @transform_2, window_bounds = array<i64: 1, 256, 8>}, {transform_indices = @transform_3, window_bounds = array<i64: 1, 2, 8>}]} {
    %c0 = arith.constant 0 : index
    %c0_0 = arith.constant 0 : index
    %c0_1 = arith.constant 0 : index
    %c0_2 = arith.constant 0 : index
    %0 = vector.load %arg1[%c0, %c0_0, %c0_1, %c0_2] : memref<1x18x18x4xbf16, #tpu.memory_space<vmem>>, vector<1x16x16x4xbf16>
    %1 = vector.shape_cast %0 : vector<1x16x16x4xbf16> to vector<16x16x4xbf16>
    %c0_3 = arith.constant 0 : index
    %c0_4 = arith.constant 0 : index
    %c1 = arith.constant 1 : index
    %c0_5 = arith.constant 0 : index
    %2 = vector.load %arg1[%c0_3, %c0_4, %c1, %c0_5] : memref<1x18x18x4xbf16, #tpu.memory_space<vmem>>, vector<1x16x16x4xbf16>
    %3 = vector.shape_cast %2 : vector<1x16x16x4xbf16> to vector<16x16x4xbf16>
    %c0_6 = arith.constant 0 : index
    %c0_7 = arith.constant 0 : index
    %c2 = arith.constant 2 : index
    %c0_8 = arith.constant 0 : index
    %4 = vector.load %arg1[%c0_6, %c0_7, %c2, %c0_8] : memref<1x18x18x4xbf16, #tpu.memory_space<vmem>>, vector<1x16x16x4xbf16>
    %5 = vector.shape_cast %4 : vector<1x16x16x4xbf16> to vector<16x16x4xbf16>
    %c0_9 = arith.constant 0 : index
    %c1_10 = arith.constant 1 : index
    %c0_11 = arith.constant 0 : index
    %c0_12 = arith.constant 0 : index
    %6 = vector.load %arg1[%c0_9, %c1_10, %c0_11, %c0_12] : memref<1x18x18x4xbf16, #tpu.memory_space<vmem>>, vector<1x16x16x4xbf16>
    %7 = vector.shape_cast %6 : vector<1x16x16x4xbf16> to vector<16x16x4xbf16>
    %c0_13 = arith.constant 0 : index
    %c1_14 = arith.constant 1 : index
    %c1_15 = arith.constant 1 : index
    %c0_16 = arith.constant 0 : index
    %8 = vector.load %arg1[%c0_13, %c1_14, %c1_15, %c0_16] : memref<1x18x18x4xbf16, #tpu.memory_space<vmem>>, vector<1x16x16x4xbf16>
    %9 = vector.shape_cast %8 : vector<1x16x16x4xbf16> to vector<16x16x4xbf16>
    %c0_17 = arith.constant 0 : index
    %c1_18 = arith.constant 1 : index
    %c2_19 = arith.constant 2 : index
    %c0_20 = arith.constant 0 : index
    %10 = vector.load %arg1[%c0_17, %c1_18, %c2_19, %c0_20] : memref<1x18x18x4xbf16, #tpu.memory_space<vmem>>, vector<1x16x16x4xbf16>
    %11 = vector.shape_cast %10 : vector<1x16x16x4xbf16> to vector<16x16x4xbf16>
    %c0_21 = arith.constant 0 : index
    %c2_22 = arith.constant 2 : index
    %c0_23 = arith.constant 0 : index
    %c0_24 = arith.constant 0 : index
    %12 = vector.load %arg1[%c0_21, %c2_22, %c0_23, %c0_24] : memref<1x18x18x4xbf16, #tpu.memory_space<vmem>>, vector<1x16x16x4xbf16>
    %13 = vector.shape_cast %12 : vector<1x16x16x4xbf16> to vector<16x16x4xbf16>
    %c0_25 = arith.constant 0 : index
    %c2_26 = arith.constant 2 : index
    %c1_27 = arith.constant 1 : index
    %c0_28 = arith.constant 0 : index
    %14 = vector.load %arg1[%c0_25, %c2_26, %c1_27, %c0_28] : memref<1x18x18x4xbf16, #tpu.memory_space<vmem>>, vector<1x16x16x4xbf16>
    %15 = vector.shape_cast %14 : vector<1x16x16x4xbf16> to vector<16x16x4xbf16>
    %c0_29 = arith.constant 0 : index
    %c2_30 = arith.constant 2 : index
    %c2_31 = arith.constant 2 : index
    %c0_32 = arith.constant 0 : index
    %16 = vector.load %arg1[%c0_29, %c2_30, %c2_31, %c0_32] : memref<1x18x18x4xbf16, #tpu.memory_space<vmem>>, vector<1x16x16x4xbf16>
    %17 = vector.shape_cast %16 : vector<1x16x16x4xbf16> to vector<16x16x4xbf16>
    %18 = tpu.concatenate %1, %3, %5, %7, %9, %11, %13, %15, %17 in 2 : vector<16x16x4xbf16>, vector<16x16x4xbf16>, vector<16x16x4xbf16>, vector<16x16x4xbf16>, vector<16x16x4xbf16>, vector<16x16x4xbf16>, vector<16x16x4xbf16>, vector<16x16x4xbf16>, vector<16x16x4xbf16> -> vector<16x16x36xbf16>
    %19 = vector.shape_cast %18 : vector<16x16x36xbf16> to vector<256x36xbf16>
    %c0_33 = arith.constant 0 : index
    %c0_34 = arith.constant 0 : index
    %20 = vector.load %arg2[%c0_33, %c0_34] : memref<36x128xbf16, #tpu.memory_space<vmem>>, vector<36x128xbf16>
    %cst = arith.constant dense<0.000000e+00> : vector<256x128xf32>
    %21 = tpu.matmul %19, %20, %cst {dimension_numbers = #tpu.dot_dimension_numbers<[1], [0], [0], [1], [0, 0, 1, 1], [], []>} : vector<256x36xbf16>, vector<36x128xbf16>, vector<256x128xf32> -> vector<256x128xf32>
    %22 = vector.extract_strided_slice %21 {offsets = [0, 0], sizes = [256, 8], strides = [1, 1]} : vector<256x128xf32> to vector<256x8xf32>
    %c0_35 = arith.constant 0 : index
    %c0_36 = arith.constant 0 : index
    %c0_37 = arith.constant 0 : index
    %23 = vector.load %arg3[%c0_35, %c0_36, %c0_37] : memref<1x256x8xf32, #tpu.memory_space<vmem>>, vector<1x256x8xf32>
    %24 = vector.shape_cast %23 : vector<1x256x8xf32> to vector<256x8xf32>
    %25 = vector.shape_cast %22 : vector<256x8xf32> to vector<1x256x8xf32>
    tpu.vector_store %arg3[%c0_35, %c0_36, %c0_37], %25 {strides = array<i32>} : memref<1x256x8xf32, #tpu.memory_space<vmem>>, vector<1x256x8xf32>,
    %cst_38 = arith.constant dense<0.000000e+00> : vector<128xf32>
    %26 = vector.multi_reduction <add>, %21, %cst_38 [0] : vector<256x128xf32> to vector<128xf32>
    %27 = vector.shape_cast %26 : vector<128xf32> to vector<1x128xf32>
    %cst_39 = arith.constant 3.906250e-03 : f32
    %28 = vector.broadcast %cst_39 : f32 to vector<1x128xf32>
    %29 = arith.mulf %27, %28 : vector<1x128xf32>
    %30 = vector.broadcast %29 : vector<1x128xf32> to vector<256x128xf32>
    %31 = arith.subf %21, %30 : vector<256x128xf32>
    %32 = arith.mulf %31, %31 : vector<256x128xf32>
    %cst_40 = arith.constant dense<0.000000e+00> : vector<128xf32>
    %33 = vector.multi_reduction <add>, %32, %cst_40 [0] : vector<256x128xf32> to vector<128xf32>
    %34 = vector.shape_cast %33 : vector<128xf32> to vector<1x128xf32>
    %35 = vector.extract_strided_slice %29 {offsets = [0, 0], sizes = [1, 8], strides = [1, 1]} : vector<1x128xf32> to vector<1x8xf32>
    %36 = vector.extract_strided_slice %34 {offsets = [0, 0], sizes = [1, 8], strides = [1, 1]} : vector<1x128xf32> to vector<1x8xf32>
    %37 = tpu.concatenate %35, %36 in 0 : vector<1x8xf32>, vector<1x8xf32> -> vector<2x8xf32>
    %c0_41 = arith.constant 0 : index
    %c0_42 = arith.constant 0 : index
    %c0_43 = arith.constant 0 : index
    %38 = vector.load %arg4[%c0_41, %c0_42, %c0_43] : memref<1x2x8xf32, #tpu.memory_space<vmem>>, vector<1x2x8xf32>
    %39 = vector.shape_cast %38 : vector<1x2x8xf32> to vector<2x8xf32>
    %40 = vector.shape_cast %37 : vector<2x8xf32> to vector<1x2x8xf32>
    tpu.vector_store %arg4[%c0_41, %c0_42, %c0_43], %40 {strides = array<i32>} : memref<1x2x8xf32, #tpu.memory_space<vmem>>, vector<1x2x8xf32>,
    return
  }
  func.func @transform_0(%arg0: i32) -> (i32, i32, i32, i32) {
    %c0_i32 = arith.constant 0 : i32
    %c0_i32_0 = arith.constant 0 : i32
    %c0_i32_1 = arith.constant 0 : i32
    %c0_i32_2 = arith.constant 0 : i32
    return %arg0, %c0_i32, %c0_i32_0, %c0_i32_1 : i32, i32, i32, i32
  }
  func.func @transform_1(%arg0: i32) -> (i32, i32) {
    %c0_i32 = arith.constant 0 : i32
    %c0_i32_0 = arith.constant 0 : i32
    %c0_i32_1 = arith.constant 0 : i32
    return %c0_i32, %c0_i32_0 : i32, i32
  }
  func.func @transform_2(%arg0: i32) -> (i32, i32, i32) {
    %c0_i32 = arith.constant 0 : i32
    %c0_i32_0 = arith.constant 0 : i32
    %c0_i32_1 = arith.constant 0 : i32
    return %arg0, %c0_i32, %c0_i32_0 : i32, i32, i32
  }
  func.func @transform_3(%arg0: i32) -> (i32, i32, i32) {
    %c0_i32 = arith.constant 0 : i32
    %c0_i32_0 = arith.constant 0 : i32
    %c0_i32_1 = arith.constant 0 : i32
    return %arg0, %c0_i32, %c0_i32_0 : i32, i32, i32
  }
}

</mosaic_0001>

<llo_original>
// kernel: tpu_custom_call.1
$region0: #{tpu_custom_call.1}
  #allocation0 [shape = 'u32[]', space=smem, size = 0x4, offset = 0x4, fixed_abs, tag = 'smem constant byte address 0x4 - core index']
  #allocation1 [shape = 'u32[144,128]{1,0:T(1,128)}', space=vmem, size = 0x12000, scoped, tag = 'internal scratch']
  %s0 = inlined_call_operand.vmem [shape: bf16[2,18,18,4], index: 0, kind: input, shape index: {}]
  %s1 = inlined_call_operand.vmem [shape: bf16[36,128], index: 1, kind: input, shape index: {}]
  %s2 = inlined_call_operand.vmem [shape: f32[2,256,8], index: 2, kind: output, shape index: {0}]
  %s3 = inlined_call_operand.hbm [shape: f32[2,2,8], index: 3, kind: output, shape index: {1}]
  %4 = xla_tuple %s2, %s3
  %s5 = sld [smem:[#allocation0]]
  $region49: #{tpu_custom_call.1} parent=0
    _
  %s7 = ssub.s32 1, %s5
  %s8 = scalar_select 0, %s7, %s5
  $region1: #{tpu_custom_call.1} parent=0
    #allocation2 [shape = 'u8[2048]{0}', space=vmem, size = 0x800, scoped, tag = 'output window, operand 1']
    #allocation3 [shape = 's32[2]{0}', space=sflag, size = 0x8, scoped, tag = 'scoped memory for tpu_custom_call.1']
    %9 = vsyncpa [#allocation3], 0
    %s10 = scalar_lea.sflag [#allocation3], 1
    %11 = vsyncpa %s10, 0
    loop: start=0, step=1, limit=4
    $region2: #{tpu_custom_call.1} parent=1 // loop_pre_header
      _
    $region3: #{tpu_custom_call.1} parent=1 // loop_header
      %s13 = sphi 0, %s17
      %p14 = scmp.ge.s32.totalorder %s13, 4
      %s23 = sphi 0, %s25
      %s26 = sphi 0, %s23
      %s27 = sphi 0, %s26
      %s43 = sphi 0, %s27
      %s47 = sphi 0, %s47
      %s49 = sphi 0, %s47
      %s50 = sphi 0, %s49
      %s64 = sphi 0, %s50
      %s70 = sphi 0, %s72
      %s73 = sphi 0, %s70
      %s74 = sphi 0, %s73
      %s90 = sphi 0, %s74
      %s96 = sphi 0, %s98
      %s99 = sphi 0, %s96
      %s100 = sphi 0, %s99
      %s116 = sphi 0, %s100
    $region4: #{tpu_custom_call.1} parent=1 // loop_header_branch
      %16 = sbr.rel (%p14) target = $region8
    $region5: #{tpu_custom_call.1} parent=1 // loop_body
      %s18 = ssub.s32 %s13, 1
      %s19 = ssub.s32 %s13, 2
      %s20 = sadd.s32 %s13, 1
      %s21 = ssub.s32 %s13, %s20
      %p22 = scmp.eq.s32.totalorder %s21, 0
      %s24 = sadd.s32 %s23, 1
      %s25 = scalar_select %p22, %s23, %s24
      %p28 = pneg %p22
      %p29 = scmp.eq.s32.totalorder %s13, 1
      %p30 = por %p28, %p29
      %p31 = scmp.ne.s32.totalorder %s23, %s26
      %p32 = scmp.eq.s32.totalorder %s13, 0
      %p33 = por %p31, %p32
      %p34 = scmp.ne.s32.totalorder %s23, %s26
      %p35 = scmp.eq.s32.totalorder %s18, 1
      %p36 = por %p34, %p35
      %p37 = scmp.ne.s32.totalorder %s26, %s27
      %p38 = scmp.eq.s32.totalorder %s18, 0
      %p39 = por %p37, %p38
      %p40 = scmp.ne.s32.totalorder %s26, %s27
      %p41 = scmp.eq.s32.totalorder %s19, 1
      %p42 = por %p40, %p41
      %p44 = scmp.ne.s32.totalorder %s27, %s43
      %p45 = scmp.eq.s32.totalorder %s19, 0
      %p46 = por %p44, %p45
      %s48 = sadd.s32 %s47, 1
      %p51 = scmp.eq.s32.totalorder %s13, 1
      %p52 = scmp.ne.s32.totalorder %s47, %s49
      %p53 = scmp.eq.s32.totalorder %s13, 0
      %p54 = por %p52, %p53
      %p55 = scmp.ne.s32.totalorder %s47, %s49
      %p56 = scmp.eq.s32.totalorder %s18, 1
      %p57 = por %p55, %p56
      %p58 = scmp.ne.s32.totalorder %s49, %s50
      %p59 = scmp.eq.s32.totalorder %s18, 0
      %p60 = por %p58, %p59
      %p61 = scmp.ne.s32.totalorder %s49, %s50
      %p62 = scmp.eq.s32.totalorder %s19, 1
      %p63 = por %p61, %p62
      %p65 = scmp.ne.s32.totalorder %s50, %s64
      %p66 = scmp.eq.s32.totalorder %s19, 0
      %p67 = por %p65, %p66
      %s68 = ssub.s32 %s13, %s20
      %p69 = scmp.eq.s32.totalorder %s68, 0
      %s71 = sadd.s32 %s70, 1
      %s72 = scalar_select %p69, %s70, %s71
      %p75 = pneg %p69
      %p76 = scmp.eq.s32.totalorder %s13, 1
      %p77 = por %p75, %p76
      %p78 = scmp.ne.s32.totalorder %s70, %s73
      %p79 = scmp.eq.s32.totalorder %s13, 0
      %p80 = por %p78, %p79
      %p81 = scmp.ne.s32.totalorder %s70, %s73
      %p82 = scmp.eq.s32.totalorder %s18, 1
      %p83 = por %p81, %p82
      %p84 = scmp.ne.s32.totalorder %s73, %s74
      %p85 = scmp.eq.s32.totalorder %s18, 0
      %p86 = por %p84, %p85
      %p87 = scmp.ne.s32.totalorder %s73, %s74
      %p88 = scmp.eq.s32.totalorder %s19, 1
      %p89 = por %p87, %p88
      %p91 = scmp.ne.s32.totalorder %s74, %s90
      %p92 = scmp.eq.s32.totalorder %s19, 0
      %p93 = por %p91, %p92
      %s94 = ssub.s32 %s13, %s20
      %p95 = scmp.eq.s32.totalorder %s94, 0
      %s97 = sadd.s32 %s96, 1
      %s98 = scalar_select %p95, %s96, %s97
      %p101 = pneg %p95
      %p102 = scmp.eq.s32.totalorder %s13, 1
      %p103 = por %p101, %p102
      %p104 = scmp.ne.s32.totalorder %s96, %s99
      %p105 = scmp.eq.s32.totalorder %s13, 0
      %p106 = por %p104, %p105
      %p107 = scmp.ne.s32.totalorder %s96, %s99
      %p108 = scmp.eq.s32.totalorder %s18, 1
      %p109 = por %p107, %p108
      %p110 = scmp.ne.s32.totalorder %s99, %s100
      %p111 = scmp.eq.s32.totalorder %s18, 0
      %p112 = por %p110, %p111
      %p113 = scmp.ne.s32.totalorder %s99, %s100
      %p114 = scmp.eq.s32.totalorder %s19, 1
      %p115 = por %p113, %p114
      %p117 = scmp.ne.s32.totalorder %s100, %s116
      %p118 = scmp.eq.s32.totalorder %s19, 0
      %p119 = por %p117, %p118
      %p120 = scmp.le.s32.totalorder 1, %s13
      %p121 = scmp.lt.s32.totalorder %s13, 3
      %p122 = pnand %p120, %p121
      %p123 = pneg %p122
      // Predicated region
      $region9: #{tpu_custom_call.1} parent=5 // pred_check
        _
      $region10: #{tpu_custom_call.1} parent=5 // pred_check_branch
        %125 = sbr.rel (%p122) target = $region12
      $region11: #{tpu_custom_call.1} parent=5 // pred_region
        %s126 = ssub.s32 %s13, 1
        // Predicated region
        $region13: #{tpu_custom_call.1} parent=11 // pred_check
          %p127 = pneg %p60
        $region14: #{tpu_custom_call.1} parent=11 // pred_check_branch
          %129 = sbr.rel (%p127) target = $region16
        $region15: #{tpu_custom_call.1} parent=11 // pred_region
          _
        $region16: #{tpu_custom_call.1} parent=11 // pred_fallthru
          _
      $region12: #{tpu_custom_call.1} parent=5 // pred_fallthru
        _
      %p130 = scmp.lt.s32.totalorder %s13, 2
      // Predicated region
      $region17: #{tpu_custom_call.1} parent=5 // pred_check
        %p131 = pneg %p130
      $region18: #{tpu_custom_call.1} parent=5 // pred_check_branch
        %133 = sbr.rel (%p131) target = $region20
      $region19: #{tpu_custom_call.1} parent=5 // pred_region
        // Predicated region
        $region21: #{tpu_custom_call.1} parent=19 // pred_check
          %p134 = pneg %p33
        $region22: #{tpu_custom_call.1} parent=19 // pred_check_branch
          %136 = sbr.rel (%p134) target = $region24
        $region23: #{tpu_custom_call.1} parent=19 // pred_region
          %p137 = scmp.lt.s32.totalorder %s13, 1
          %s138 = scalar_select %p137, %s13, 1
          %s139 = smul.addr %s138, 54
          %s140 = smul.addr %s139, 4
          %s141 = scalar_lea.vmem %s0, %s140
        $region24: #{tpu_custom_call.1} parent=19 // pred_fallthru
          _
      $region20: #{tpu_custom_call.1} parent=5 // pred_fallthru
        _
      %p142 = scmp.le.s32.totalorder 1, %s13
      %p143 = scmp.lt.s32.totalorder %s13, 3
      %p144 = pnand %p142, %p143
      %p145 = pneg %p144
      // Predicated region
      $region25: #{tpu_custom_call.1} parent=5 // pred_check
        _
      $region26: #{tpu_custom_call.1} parent=5 // pred_check_branch
        %147 = sbr.rel (%p144) target = $region28
      $region27: #{tpu_custom_call.1} parent=5 // pred_region
        %s148 = ssub.s32 %s13, 1
        %p149 = scmp.lt.s32.totalorder %s18, 1
        %s150 = scalar_select %p149, %s18, 1
        %s151 = smul.addr %s150, 54
        %s152 = smul.addr %s151, 4
        %s153 = scalar_lea.vmem %s0, %s152
        %p154 = pneg %p39
        %p155 = pneg %p36
        %p156 = pneg %p60
        %p157 = pneg %p57
        %p158 = pneg %p86
        %p159 = pneg %p83
        %p160 = scmp.lt.s32.totalorder %s18, 1
        %s161 = scalar_select %p160, %s18, 1
        %s162 = smul.addr %s161, 32
        %s163 = smul.addr %s162, 8
        %s164 = scalar_lea.vmem %s2, %s163
        %p165 = pneg %p112
        %p166 = pneg %p109
        %s167 = sand.u32 %s99, 1
        %s168 = scalar_lea.sflag [#allocation3], %s167
        %s169 = sand.u32 %s99, 1
        %s170 = smul.addr %s169, 2
        %s171 = scalar_lea.vmem [#allocation2], %s170
        %p172 = scmp.lt.s32.totalorder %s18, 1
        %s173 = scalar_select %p172, %s18, 1
        %s174 = smul.addr %s173, 54
        %s175 = smul.addr %s174, 4
        %s176 = scalar_lea.vmem %s0, %s175
        %p177 = scmp.lt.s32.totalorder %s18, 1
        %s178 = scalar_select %p177, %s18, 1
        %s179 = smul.addr %s178, 32
        %s180 = smul.addr %s179, 8
        %s181 = scalar_lea.vmem %s2, %s180
        %v183 = vld [vmem:[%s176] sm:$0xf]
        %v184 = vld [vmem:[%s176 + $0x4] sm:$0xf]
        %v185 = vld [vmem:[%s176 + $0xc] sm:$0xf]
        %v186 = vld [vmem:[%s176 + $0x10] sm:$0xf]
        %v187 = vld [vmem:[%s176 + $0x18] sm:$0xf]
        %v188 = vld [vmem:[%s176 + $0x1c] sm:$0xf]
        %v189 = vld [vmem:[%s176 + $0x24] sm:$0xf]
        %v190 = vld [vmem:[%s176 + $0x28] sm:$0xf]
        %v191 = vld [vmem:[%s176 + $0x30] sm:$0xf]
        %v192 = vld [vmem:[%s176 + $0x34] sm:$0xf]
        %v193 = vld [vmem:[%s176 + $0x3c] sm:$0xf]
        %v194 = vld [vmem:[%s176 + $0x40] sm:$0xf]
        %v195 = vld [vmem:[%s176 + $0x48] sm:$0xf]
        %v196 = vld [vmem:[%s176 + $0x4c] sm:$0xf]
        %v197 = vld [vmem:[%s176 + $0x54] sm:$0xf]
        %v198 = vld [vmem:[%s176 + $0x58] sm:$0xf]
        %v199 = vld [vmem:[%s176 + $0x60] sm:$0xf]
        %v200 = vld [vmem:[%s176 + $0x64] sm:$0xf]
        %v201 = vld [vmem:[%s176 + $0x6c] sm:$0xf]
        %v202 = vld [vmem:[%s176 + $0x70] sm:$0xf]
        %v203 = vld [vmem:[%s176 + $0x78] sm:$0xf]
        %v204 = vld [vmem:[%s176 + $0x7c] sm:$0xf]
        %v205 = vld [vmem:[%s176 + $0x84] sm:$0xf]
        %v206 = vld [vmem:[%s176 + $0x88] sm:$0xf]
        %v207 = vld [vmem:[%s176 + $0x90] sm:$0xf]
        %v208 = vld [vmem:[%s176 + $0x94] sm:$0xf]
        %v209 = vld [vmem:[%s176 + $0x9c] sm:$0xf]
        %v210 = vld [vmem:[%s176 + $0xa0] sm:$0xf]
        %v211 = vld [vmem:[%s176 + $0xa8] sm:$0xf]
        %v212 = vld [vmem:[%s176 + $0xac] sm:$0xf]
        %v213 = vld [vmem:[%s176 + $0xb4] sm:$0xf]
        %v214 = vld [vmem:[%s176 + $0xb8] sm:$0xf]
        %v215 = vld [vmem:[%s176 + $0x8] sm:$0x1]
        %v216 = vld [vmem:[%s176 + $0x14] sm:$0x1]
        %v217 = vld [vmem:[%s176 + $0x20] sm:$0x1]
        %v218 = vld [vmem:[%s176 + $0x2c] sm:$0x1]
        %v219 = vld [vmem:[%s176 + $0x38] sm:$0x1]
        %v220 = vld [vmem:[%s176 + $0x44] sm:$0x1]
        %v221 = vld [vmem:[%s176 + $0x50] sm:$0x1]
        %v222 = vld [vmem:[%s176 + $0x5c] sm:$0x1]
        %v223 = vld [vmem:[%s176 + $0x68] sm:$0x1]
        %v224 = vld [vmem:[%s176 + $0x74] sm:$0x1]
        %v225 = vld [vmem:[%s176 + $0x80] sm:$0x1]
        %v226 = vld [vmem:[%s176 + $0x8c] sm:$0x1]
        %v227 = vld [vmem:[%s176 + $0x98] sm:$0x1]
        %v228 = vld [vmem:[%s176 + $0xa4] sm:$0x1]
        %v229 = vld [vmem:[%s176 + $0xb0] sm:$0x1]
        %v230 = vld [vmem:[%s176 + $0xbc] sm:$0x1]
        %v231 = vld [vmem:[%s176] sm:$0xe]
        %v232 = vld [vmem:[%s176 + $0xc] sm:$0xe]
        %v233 = vld [vmem:[%s176 + $0x18] sm:$0xe]
        %v234 = vld [vmem:[%s176 + $0x24] sm:$0xe]
        %v235 = vld [vmem:[%s176 + $0x30] sm:$0xe]
        %v236 = vld [vmem:[%s176 + $0x3c] sm:$0xe]
        %v237 = vld [vmem:[%s176 + $0x48] sm:$0xe]
        %v238 = vld [vmem:[%s176 + $0x54] sm:$0xe]
        %v239 = vld [vmem:[%s176 + $0x60] sm:$0xe]
        %v240 = vld [vmem:[%s176 + $0x6c] sm:$0xe]
        %v241 = vld [vmem:[%s176 + $0x78] sm:$0xe]
        %v242 = vld [vmem:[%s176 + $0x84] sm:$0xe]
        %v243 = vld [vmem:[%s176 + $0x90] sm:$0xe]
        %v244 = vld [vmem:[%s176 + $0x9c] sm:$0xe]
        %v245 = vld [vmem:[%s176 + $0xa8] sm:$0xe]
        %v246 = vld [vmem:[%s176 + $0xb4] sm:$0xe]
        %s247 = scalar_lea.vmem %s176, 12
        %v248 = vld [vmem:[%s247] sm:$0xf]
        %v249 = vld [vmem:[%s247 + $0x4] sm:$0xf]
        %v250 = vld [vmem:[%s247 + $0xc] sm:$0xf]
        %v251 = vld [vmem:[%s247 + $0x10] sm:$0xf]
        %v252 = vld [vmem:[%s247 + $0x18] sm:$0xf]
        %v253 = vld [vmem:[%s247 + $0x1c] sm:$0xf]
        %v254 = vld [vmem:[%s247 + $0x24] sm:$0xf]
        %v255 = vld [vmem:[%s247 + $0x28] sm:$0xf]
        %v256 = vld [vmem:[%s247 + $0x30] sm:$0xf]
        %v257 = vld [vmem:[%s247 + $0x34] sm:$0xf]
        %v258 = vld [vmem:[%s247 + $0x3c] sm:$0xf]
        %v259 = vld [vmem:[%s247 + $0x40] sm:$0xf]
        %v260 = vld [vmem:[%s247 + $0x48] sm:$0xf]
        %v261 = vld [vmem:[%s247 + $0x4c] sm:$0xf]
        %v262 = vld [vmem:[%s247 + $0x54] sm:$0xf]
        %v263 = vld [vmem:[%s247 + $0x58] sm:$0xf]
        %v264 = vld [vmem:[%s247 + $0x60] sm:$0xf]
        %v265 = vld [vmem:[%s247 + $0x64] sm:$0xf]
        %v266 = vld [vmem:[%s247 + $0x6c] sm:$0xf]
        %v267 = vld [vmem:[%s247 + $0x70] sm:$0xf]
        %v268 = vld [vmem:[%s247 + $0x78] sm:$0xf]
        %v269 = vld [vmem:[%s247 + $0x7c] sm:$0xf]
        %v270 = vld [vmem:[%s247 + $0x84] sm:$0xf]
        %v271 = vld [vmem:[%s247 + $0x88] sm:$0xf]
        %v272 = vld [vmem:[%s247 + $0x90] sm:$0xf]
        %v273 = vld [vmem:[%s247 + $0x94] sm:$0xf]
        %v274 = vld [vmem:[%s247 + $0x9c] sm:$0xf]
        %v275 = vld [vmem:[%s247 + $0xa0] sm:$0xf]
        %v276 = vld [vmem:[%s247 + $0xa8] sm:$0xf]
        %v277 = vld [vmem:[%s247 + $0xac] sm:$0xf]
        %v278 = vld [vmem:[%s247 + $0xb4] sm:$0xf]
        %v279 = vld [vmem:[%s247 + $0xb8] sm:$0xf]
        %v280 = vld [vmem:[%s247 + $0x8] sm:$0x1]
        %v281 = vld [vmem:[%s247 + $0x14] sm:$0x1]
        %v282 = vld [vmem:[%s247 + $0x20] sm:$0x1]
        %v283 = vld [vmem:[%s247 + $0x2c] sm:$0x1]
        %v284 = vld [vmem:[%s247 + $0x38] sm:$0x1]
        %v285 = vld [vmem:[%s247 + $0x44] sm:$0x1]
        %v286 = vld [vmem:[%s247 + $0x50] sm:$0x1]
        %v287 = vld [vmem:[%s247 + $0x5c] sm:$0x1]
        %v288 = vld [vmem:[%s247 + $0x68] sm:$0x1]
        %v289 = vld [vmem:[%s247 + $0x74] sm:$0x1]
        %v290 = vld [vmem:[%s247 + $0x80] sm:$0x1]
        %v291 = vld [vmem:[%s247 + $0x8c] sm:$0x1]
        %v292 = vld [vmem:[%s247 + $0x98] sm:$0x1]
        %v293 = vld [vmem:[%s247 + $0xa4] sm:$0x1]
        %v294 = vld [vmem:[%s247 + $0xb0] sm:$0x1]
        %v295 = vld [vmem:[%s247 + $0xbc] sm:$0x1]
        %v296 = vld [vmem:[%s247] sm:$0xe]
        %v297 = vld [vmem:[%s247 + $0xc] sm:$0xe]
        %v298 = vld [vmem:[%s247 + $0x18] sm:$0xe]
        %v299 = vld [vmem:[%s247 + $0x24] sm:$0xe]
        %v300 = vld [vmem:[%s247 + $0x30] sm:$0xe]
        %v301 = vld [vmem:[%s247 + $0x3c] sm:$0xe]
        %v302 = vld [vmem:[%s247 + $0x48] sm:$0xe]
        %v303 = vld [vmem:[%s247 + $0x54] sm:$0xe]
        %v304 = vld [vmem:[%s247 + $0x60] sm:$0xe]
        %v305 = vld [vmem:[%s247 + $0x6c] sm:$0xe]
        %v306 = vld [vmem:[%s247 + $0x78] sm:$0xe]
        %v307 = vld [vmem:[%s247 + $0x84] sm:$0xe]
        %v308 = vld [vmem:[%s247 + $0x90] sm:$0xe]
        %v309 = vld [vmem:[%s247 + $0x9c] sm:$0xe]
        %v310 = vld [vmem:[%s247 + $0xa8] sm:$0xe]
        %v311 = vld [vmem:[%s247 + $0xb4] sm:$0xe]
        %s312 = scalar_lea.vmem %s176, 24
        %v313 = vld [vmem:[%s312] sm:$0xf]
        %v314 = vld [vmem:[%s312 + $0x4] sm:$0xf]
        %v315 = vld [vmem:[%s312 + $0xc] sm:$0xf]
        %v316 = vld [vmem:[%s312 + $0x10] sm:$0xf]
        %v317 = vld [vmem:[%s312 + $0x18] sm:$0xf]
        %v318 = vld [vmem:[%s312 + $0x1c] sm:$0xf]
        %v319 = vld [vmem:[%s312 + $0x24] sm:$0xf]
        %v320 = vld [vmem:[%s312 + $0x28] sm:$0xf]
        %v321 = vld [vmem:[%s312 + $0x30] sm:$0xf]
        %v322 = vld [vmem:[%s312 + $0x34] sm:$0xf]
        %v323 = vld [vmem:[%s312 + $0x3c] sm:$0xf]
        %v324 = vld [vmem:[%s312 + $0x40] sm:$0xf]
        %v325 = vld [vmem:[%s312 + $0x48] sm:$0xf]
        %v326 = vld [vmem:[%s312 + $0x4c] sm:$0xf]
        %v327 = vld [vmem:[%s312 + $0x54] sm:$0xf]
        %v328 = vld [vmem:[%s312 + $0x58] sm:$0xf]
        %v329 = vld [vmem:[%s312 + $0x60] sm:$0xf]
        %v330 = vld [vmem:[%s312 + $0x64] sm:$0xf]
        %v331 = vld [vmem:[%s312 + $0x6c] sm:$0xf]
        %v332 = vld [vmem:[%s312 + $0x70] sm:$0xf]
        %v333 = vld [vmem:[%s312 + $0x78] sm:$0xf]
        %v334 = vld [vmem:[%s312 + $0x7c] sm:$0xf]
        %v335 = vld [vmem:[%s312 + $0x84] sm:$0xf]
        %v336 = vld [vmem:[%s312 + $0x88] sm:$0xf]
        %v337 = vld [vmem:[%s312 + $0x90] sm:$0xf]
        %v338 = vld [vmem:[%s312 + $0x94] sm:$0xf]
        %v339 = vld [vmem:[%s312 + $0x9c] sm:$0xf]
        %v340 = vld [vmem:[%s312 + $0xa0] sm:$0xf]
        %v341 = vld [vmem:[%s312 + $0xa8] sm:$0xf]
        %v342 = vld [vmem:[%s312 + $0xac] sm:$0xf]
        %v343 = vld [vmem:[%s312 + $0xb4] sm:$0xf]
        %v344 = vld [vmem:[%s312 + $0xb8] sm:$0xf]
        %v345 = vld [vmem:[%s312 + $0x8] sm:$0x1]
        %v346 = vld [vmem:[%s312 + $0x14] sm:$0x1]
        %v347 = vld [vmem:[%s312 + $0x20] sm:$0x1]
        %v348 = vld [vmem:[%s312 + $0x2c] sm:$0x1]
        %v349 = vld [vmem:[%s312 + $0x38] sm:$0x1]
        %v350 = vld [vmem:[%s312 + $0x44] sm:$0x1]
        %v351 = vld [vmem:[%s312 + $0x50] sm:$0x1]
        %v352 = vld [vmem:[%s312 + $0x5c] sm:$0x1]
        %v353 = vld [vmem:[%s312 + $0x68] sm:$0x1]
        %v354 = vld [vmem:[%s312 + $0x74] sm:$0x1]
        %v355 = vld [vmem:[%s312 + $0x80] sm:$0x1]
        %v356 = vld [vmem:[%s312 + $0x8c] sm:$0x1]
        %v357 = vld [vmem:[%s312 + $0x98] sm:$0x1]
        %v358 = vld [vmem:[%s312 + $0xa4] sm:$0x1]
        %v359 = vld [vmem:[%s312 + $0xb0] sm:$0x1]
        %v360 = vld [vmem:[%s312 + $0xbc] sm:$0x1]
        %v361 = vld [vmem:[%s312] sm:$0xe]
        %v362 = vld [vmem:[%s312 + $0xc] sm:$0xe]
        %v363 = vld [vmem:[%s312 + $0x18] sm:$0xe]
        %v364 = vld [vmem:[%s312 + $0x24] sm:$0xe]
        %v365 = vld [vmem:[%s312 + $0x30] sm:$0xe]
        %v366 = vld [vmem:[%s312 + $0x3c] sm:$0xe]
        %v367 = vld [vmem:[%s312 + $0x48] sm:$0xe]
        %v368 = vld [vmem:[%s312 + $0x54] sm:$0xe]
        %v369 = vld [vmem:[%s312 + $0x60] sm:$0xe]
        %v370 = vld [vmem:[%s312 + $0x6c] sm:$0xe]
        %v371 = vld [vmem:[%s312 + $0x78] sm:$0xe]
        %v372 = vld [vmem:[%s312 + $0x84] sm:$0xe]
        %v373 = vld [vmem:[%s312 + $0x90] sm:$0xe]
        %v374 = vld [vmem:[%s312 + $0x9c] sm:$0xe]
        %v375 = vld [vmem:[%s312 + $0xa8] sm:$0xe]
        %v376 = vld [vmem:[%s312 + $0xb4] sm:$0xe]
        %v409 = vunpack.c.l.b16 %v183
        %v410 = vunpack.c.l.b16 %v184
        %v411 = vunpack.c.l.b16 %v185
        %v412 = vunpack.c.l.b16 %v186
        %v413 = vunpack.c.l.b16 %v187
        %v414 = vunpack.c.l.b16 %v188
        %v415 = vunpack.c.l.b16 %v189
        %v416 = vunpack.c.l.b16 %v190
        %v417 = vunpack.c.l.b16 %v191
        %v418 = vunpack.c.l.b16 %v192
        %v419 = vunpack.c.l.b16 %v193
        %v420 = vunpack.c.l.b16 %v194
        %v421 = vunpack.c.l.b16 %v195
        %v422 = vunpack.c.l.b16 %v196
        %v423 = vunpack.c.l.b16 %v197
        %v424 = vunpack.c.l.b16 %v198
        %v425 = vunpack.c.l.b16 %v199
        %v426 = vunpack.c.l.b16 %v200
        %v427 = vunpack.c.l.b16 %v201
        %v428 = vunpack.c.l.b16 %v202
        %v429 = vunpack.c.l.b16 %v203
        %v430 = vunpack.c.l.b16 %v204
        %v431 = vunpack.c.l.b16 %v205
        %v432 = vunpack.c.l.b16 %v206
        %v433 = vunpack.c.l.b16 %v207
        %v434 = vunpack.c.l.b16 %v208
        %v435 = vunpack.c.l.b16 %v209
        %v436 = vunpack.c.l.b16 %v210
        %v437 = vunpack.c.l.b16 %v211
        %v438 = vunpack.c.l.b16 %v212
        %v439 = vunpack.c.l.b16 %v213
        %v440 = vunpack.c.l.b16 %v214
        %v441 = vpack.c.b16 %v410, %v409
        %v442 = vpack.c.b16 %v412, %v411
        %v443 = vpack.c.b16 %v414, %v413
        %v444 = vpack.c.b16 %v416, %v415
        %v445 = vpack.c.b16 %v418, %v417
        %v446 = vpack.c.b16 %v420, %v419
        %v447 = vpack.c.b16 %v422, %v421
        %v448 = vpack.c.b16 %v424, %v423
        %v449 = vpack.c.b16 %v426, %v425
        %v450 = vpack.c.b16 %v428, %v427
        %v451 = vpack.c.b16 %v430, %v429
        %v452 = vpack.c.b16 %v432, %v431
        %v453 = vpack.c.b16 %v434, %v433
        %v454 = vpack.c.b16 %v436, %v435
        %v455 = vpack.c.b16 %v438, %v437
        %v456 = vpack.c.b16 %v440, %v439
        %v473 = vunpack.c.l.b16 %v215
        %v474 = vunpack.c.l.b16 %v216
        %v475 = vunpack.c.l.b16 %v217
        %v476 = vunpack.c.l.b16 %v218
        %v477 = vunpack.c.l.b16 %v219
        %v478 = vunpack.c.l.b16 %v220
        %v479 = vunpack.c.l.b16 %v221
        %v480 = vunpack.c.l.b16 %v222
        %v481 = vunpack.c.l.b16 %v223
        %v482 = vunpack.c.l.b16 %v224
        %v483 = vunpack.c.l.b16 %v225
        %v484 = vunpack.c.l.b16 %v226
        %v485 = vunpack.c.l.b16 %v227
        %v486 = vunpack.c.l.b16 %v228
        %v487 = vunpack.c.l.b16 %v229
        %v488 = vunpack.c.l.b16 %v230
        %v489 = vpack.c.b16 %v473, %v473
        %v490 = vpack.c.b16 %v474, %v474
        %v491 = vpack.c.b16 %v475, %v475
        %v492 = vpack.c.b16 %v476, %v476
        %v493 = vpack.c.b16 %v477, %v477
        %v494 = vpack.c.b16 %v478, %v478
        %v495 = vpack.c.b16 %v479, %v479
        %v496 = vpack.c.b16 %v480, %v480
        %v497 = vpack.c.b16 %v481, %v481
        %v498 = vpack.c.b16 %v482, %v482
        %v499 = vpack.c.b16 %v483, %v483
        %v500 = vpack.c.b16 %v484, %v484
        %v501 = vpack.c.b16 %v485, %v485
        %v502 = vpack.c.b16 %v486, %v486
        %v503 = vpack.c.b16 %v487, %v487
        %v504 = vpack.c.b16 %v488, %v488
        %vm505 = vsmask.f32 7424
        %v507 = vshrl.u32 %v441, 16
        %v509 = vshll.u32 %v441, 16
        %v511 = vrot.slane %v509, 1
        %v512 = vor.u32 %v507, %v511
        %v514 = vshll.u32 %v489, 16
        %v516 = vrot.slane %v514, 1
        %v517 = vsel %vm505, %v512, %v516
        %v519 = vshrl.u32 %v442, 16
        %v521 = vshll.u32 %v442, 16
        %v523 = vrot.slane %v521, 1
        %v524 = vor.u32 %v519, %v523
        %v526 = vshll.u32 %v490, 16
        %v528 = vrot.slane %v526, 1
        %v529 = vsel %vm505, %v524, %v528
        %v531 = vshrl.u32 %v443, 16
        %v533 = vshll.u32 %v443, 16
        %v535 = vrot.slane %v533, 1
        %v536 = vor.u32 %v531, %v535
        %v538 = vshll.u32 %v491, 16
        %v540 = vrot.slane %v538, 1
        %v541 = vsel %vm505, %v536, %v540
        %v543 = vshrl.u32 %v444, 16
        %v545 = vshll.u32 %v444, 16
        %v547 = vrot.slane %v545, 1
        %v548 = vor.u32 %v543, %v547
        %v550 = vshll.u32 %v492, 16
        %v552 = vrot.slane %v550, 1
        %v553 = vsel %vm505, %v548, %v552
        %v555 = vshrl.u32 %v445, 16
        %v557 = vshll.u32 %v445, 16
        %v559 = vrot.slane %v557, 1
        %v560 = vor.u32 %v555, %v559
        %v562 = vshll.u32 %v493, 16
        %v564 = vrot.slane %v562, 1
        %v565 = vsel %vm505, %v560, %v564
        %v567 = vshrl.u32 %v446, 16
        %v569 = vshll.u32 %v446, 16
        %v571 = vrot.slane %v569, 1
        %v572 = vor.u32 %v567, %v571
        %v574 = vshll.u32 %v494, 16
        %v576 = vrot.slane %v574, 1
        %v577 = vsel %vm505, %v572, %v576
        %v579 = vshrl.u32 %v447, 16
        %v581 = vshll.u32 %v447, 16
        %v583 = vrot.slane %v581, 1
        %v584 = vor.u32 %v579, %v583
        %v586 = vshll.u32 %v495, 16
        %v588 = vrot.slane %v586, 1
        %v589 = vsel %vm505, %v584, %v588
        %v591 = vshrl.u32 %v448, 16
        %v593 = vshll.u32 %v448, 16
        %v595 = vrot.slane %v593, 1
        %v596 = vor.u32 %v591, %v595
        %v598 = vshll.u32 %v496, 16
        %v600 = vrot.slane %v598, 1
        %v601 = vsel %vm505, %v596, %v600
        %v603 = vshrl.u32 %v449, 16
        %v605 = vshll.u32 %v449, 16
        %v607 = vrot.slane %v605, 1
        %v608 = vor.u32 %v603, %v607
        %v610 = vshll.u32 %v497, 16
        %v612 = vrot.slane %v610, 1
        %v613 = vsel %vm505, %v608, %v612
        %v615 = vshrl.u32 %v450, 16
        %v617 = vshll.u32 %v450, 16
        %v619 = vrot.slane %v617, 1
        %v620 = vor.u32 %v615, %v619
        %v622 = vshll.u32 %v498, 16
        %v624 = vrot.slane %v622, 1
        %v625 = vsel %vm505, %v620, %v624
        %v627 = vshrl.u32 %v451, 16
        %v629 = vshll.u32 %v451, 16
        %v631 = vrot.slane %v629, 1
        %v632 = vor.u32 %v627, %v631
        %v634 = vshll.u32 %v499, 16
        %v636 = vrot.slane %v634, 1
        %v637 = vsel %vm505, %v632, %v636
        %v639 = vshrl.u32 %v452, 16
        %v641 = vshll.u32 %v452, 16
        %v643 = vrot.slane %v641, 1
        %v644 = vor.u32 %v639, %v643
        %v646 = vshll.u32 %v500, 16
        %v648 = vrot.slane %v646, 1
        %v649 = vsel %vm505, %v644, %v648
        %v651 = vshrl.u32 %v453, 16
        %v653 = vshll.u32 %v453, 16
        %v655 = vrot.slane %v653, 1
        %v656 = vor.u32 %v651, %v655
        %v658 = vshll.u32 %v501, 16
        %v660 = vrot.slane %v658, 1
        %v661 = vsel %vm505, %v656, %v660
        %v663 = vshrl.u32 %v454, 16
        %v665 = vshll.u32 %v454, 16
        %v667 = vrot.slane %v665, 1
        %v668 = vor.u32 %v663, %v667
        %v670 = vshll.u32 %v502, 16
        %v672 = vrot.slane %v670, 1
        %v673 = vsel %vm505, %v668, %v672
        %v675 = vshrl.u32 %v455, 16
        %v677 = vshll.u32 %v455, 16
        %v679 = vrot.slane %v677, 1
        %v680 = vor.u32 %v675, %v679
        %v682 = vshll.u32 %v503, 16
        %v684 = vrot.slane %v682, 1
        %v685 = vsel %vm505, %v680, %v684
        %v687 = vshrl.u32 %v456, 16
        %v689 = vshll.u32 %v456, 16
        %v691 = vrot.slane %v689, 1
        %v692 = vor.u32 %v687, %v691
        %v694 = vshll.u32 %v504, 16
        %v696 = vrot.slane %v694, 1
        %v697 = vsel %vm505, %v692, %v696
        %698 = vrot.lane.b32.xlu0 %v517, 4
        %v699 = vpop.permute.xlu0 %698
        %700 = vrot.lane.b32.xlu0 %v529, 4
        %v701 = vpop.permute.xlu0 %700
        %702 = vrot.lane.b32.xlu0 %v541, 4
        %v703 = vpop.permute.xlu0 %702
        %704 = vrot.lane.b32.xlu0 %v553, 4
        %v705 = vpop.permute.xlu0 %704
        %706 = vrot.lane.b32.xlu0 %v565, 4
        %v707 = vpop.permute.xlu0 %706
        %708 = vrot.lane.b32.xlu0 %v577, 4
        %v709 = vpop.permute.xlu0 %708
        %710 = vrot.lane.b32.xlu0 %v589, 4
        %v711 = vpop.permute.xlu0 %710
        %712 = vrot.lane.b32.xlu0 %v601, 4
        %v713 = vpop.permute.xlu0 %712
        %714 = vrot.lane.b32.xlu0 %v613, 4
        %v715 = vpop.permute.xlu0 %714
        %716 = vrot.lane.b32.xlu0 %v625, 4
        %v717 = vpop.permute.xlu0 %716
        %718 = vrot.lane.b32.xlu0 %v637, 4
        %v719 = vpop.permute.xlu0 %718
        %720 = vrot.lane.b32.xlu0 %v649, 4
        %v721 = vpop.permute.xlu0 %720
        %722 = vrot.lane.b32.xlu0 %v661, 4
        %v723 = vpop.permute.xlu0 %722
        %724 = vrot.lane.b32.xlu0 %v673, 4
        %v725 = vpop.permute.xlu0 %724
        %726 = vrot.lane.b32.xlu0 %v685, 4
        %v727 = vpop.permute.xlu0 %726
        %728 = vrot.lane.b32.xlu0 %v697, 4
        %v729 = vpop.permute.xlu0 %728
        %v746 = vunpack.c.l.b16 %v231
        %v747 = vunpack.c.l.b16 %v232
        %v748 = vunpack.c.l.b16 %v233
        %v749 = vunpack.c.l.b16 %v234
        %v750 = vunpack.c.l.b16 %v235
        %v751 = vunpack.c.l.b16 %v236
        %v752 = vunpack.c.l.b16 %v237
        %v753 = vunpack.c.l.b16 %v238
        %v754 = vunpack.c.l.b16 %v239
        %v755 = vunpack.c.l.b16 %v240
        %v756 = vunpack.c.l.b16 %v241
        %v757 = vunpack.c.l.b16 %v242
        %v758 = vunpack.c.l.b16 %v243
        %v759 = vunpack.c.l.b16 %v244
        %v760 = vunpack.c.l.b16 %v245
        %v761 = vunpack.c.l.b16 %v246
        %v762 = vpack.c.b16 %v410, %v746
        %v763 = vpack.c.b16 %v412, %v747
        %v764 = vpack.c.b16 %v414, %v748
        %v765 = vpack.c.b16 %v416, %v749
        %v766 = vpack.c.b16 %v418, %v750
        %v767 = vpack.c.b16 %v420, %v751
        %v768 = vpack.c.b16 %v422, %v752
        %v769 = vpack.c.b16 %v424, %v753
        %v770 = vpack.c.b16 %v426, %v754
        %v771 = vpack.c.b16 %v428, %v755
        %v772 = vpack.c.b16 %v430, %v756
        %v773 = vpack.c.b16 %v432, %v757
        %v774 = vpack.c.b16 %v434, %v758
        %v775 = vpack.c.b16 %v436, %v759
        %v776 = vpack.c.b16 %v438, %v760
        %v777 = vpack.c.b16 %v440, %v761
        %vm778 = vcmask 1046528
        %v779 = vrot.slane %v762, 1
        %v780 = vrot.slane %v489, 1
        %v781 = vsel %vm778, %v779, %v780
        %v782 = vrot.slane %v763, 1
        %v783 = vrot.slane %v490, 1
        %v784 = vsel %vm778, %v782, %v783
        %v785 = vrot.slane %v764, 1
        %v786 = vrot.slane %v491, 1
        %v787 = vsel %vm778, %v785, %v786
        %v788 = vrot.slane %v765, 1
        %v789 = vrot.slane %v492, 1
        %v790 = vsel %vm778, %v788, %v789
        %v791 = vrot.slane %v766, 1
        %v792 = vrot.slane %v493, 1
        %v793 = vsel %vm778, %v791, %v792
        %v794 = vrot.slane %v767, 1
        %v795 = vrot.slane %v494, 1
        %v796 = vsel %vm778, %v794, %v795
        %v797 = vrot.slane %v768, 1
        %v798 = vrot.slane %v495, 1
        %v799 = vsel %vm778, %v797, %v798
        %v800 = vrot.slane %v769, 1
        %v801 = vrot.slane %v496, 1
        %v802 = vsel %vm778, %v800, %v801
        %v803 = vrot.slane %v770, 1
        %v804 = vrot.slane %v497, 1
        %v805 = vsel %vm778, %v803, %v804
        %v806 = vrot.slane %v771, 1
        %v807 = vrot.slane %v498, 1
        %v808 = vsel %vm778, %v806, %v807
        %v809 = vrot.slane %v772, 1
        %v810 = vrot.slane %v499, 1
        %v811 = vsel %vm778, %v809, %v810
        %v812 = vrot.slane %v773, 1
        %v813 = vrot.slane %v500, 1
        %v814 = vsel %vm778, %v812, %v813
        %v815 = vrot.slane %v774, 1
        %v816 = vrot.slane %v501, 1
        %v817 = vsel %vm778, %v815, %v816
        %v818 = vrot.slane %v775, 1
        %v819 = vrot.slane %v502, 1
        %v820 = vsel %vm778, %v818, %v819
        %v821 = vrot.slane %v776, 1
        %v822 = vrot.slane %v503, 1
        %v823 = vsel %vm778, %v821, %v822
        %v824 = vrot.slane %v777, 1
        %v825 = vrot.slane %v504, 1
        %v826 = vsel %vm778, %v824, %v825
        %827 = vrot.lane.b32.xlu0 %v781, 8
        %v828 = vpop.permute.xlu0 %827
        %829 = vrot.lane.b32.xlu0 %v784, 8
        %v830 = vpop.permute.xlu0 %829
        %831 = vrot.lane.b32.xlu0 %v787, 8
        %v832 = vpop.permute.xlu0 %831
        %833 = vrot.lane.b32.xlu0 %v790, 8
        %v834 = vpop.permute.xlu0 %833
        %835 = vrot.lane.b32.xlu0 %v793, 8
        %v836 = vpop.permute.xlu0 %835
        %837 = vrot.lane.b32.xlu0 %v796, 8
        %v838 = vpop.permute.xlu0 %837
        %839 = vrot.lane.b32.xlu0 %v799, 8
        %v840 = vpop.permute.xlu0 %839
        %841 = vrot.lane.b32.xlu0 %v802, 8
        %v842 = vpop.permute.xlu0 %841
        %843 = vrot.lane.b32.xlu0 %v805, 8
        %v844 = vpop.permute.xlu0 %843
        %845 = vrot.lane.b32.xlu0 %v808, 8
        %v846 = vpop.permute.xlu0 %845
        %847 = vrot.lane.b32.xlu0 %v811, 8
        %v848 = vpop.permute.xlu0 %847
        %849 = vrot.lane.b32.xlu0 %v814, 8
        %v850 = vpop.permute.xlu0 %849
        %851 = vrot.lane.b32.xlu0 %v817, 8
        %v852 = vpop.permute.xlu0 %851
        %853 = vrot.lane.b32.xlu0 %v820, 8
        %v854 = vpop.permute.xlu0 %853
        %855 = vrot.lane.b32.xlu0 %v823, 8
        %v856 = vpop.permute.xlu0 %855
        %857 = vrot.lane.b32.xlu0 %v826, 8
        %v858 = vpop.permute.xlu0 %857
        %v891 = vunpack.c.l.b16 %v248
        %v892 = vunpack.c.l.b16 %v249
        %v893 = vunpack.c.l.b16 %v250
        %v894 = vunpack.c.l.b16 %v251
        %v895 = vunpack.c.l.b16 %v252
        %v896 = vunpack.c.l.b16 %v253
        %v897 = vunpack.c.l.b16 %v254
        %v898 = vunpack.c.l.b16 %v255
        %v899 = vunpack.c.l.b16 %v256
        %v900 = vunpack.c.l.b16 %v257
        %v901 = vunpack.c.l.b16 %v258
        %v902 = vunpack.c.l.b16 %v259
        %v903 = vunpack.c.l.b16 %v260
        %v904 = vunpack.c.l.b16 %v261
        %v905 = vunpack.c.l.b16 %v262
        %v906 = vunpack.c.l.b16 %v263
        %v907 = vunpack.c.l.b16 %v264
        %v908 = vunpack.c.l.b16 %v265
        %v909 = vunpack.c.l.b16 %v266
        %v910 = vunpack.c.l.b16 %v267
        %v911 = vunpack.c.l.b16 %v268
        %v912 = vunpack.c.l.b16 %v269
        %v913 = vunpack.c.l.b16 %v270
        %v914 = vunpack.c.l.b16 %v271
        %v915 = vunpack.c.l.b16 %v272
        %v916 = vunpack.c.l.b16 %v273
        %v917 = vunpack.c.l.b16 %v274
        %v918 = vunpack.c.l.b16 %v275
        %v919 = vunpack.c.l.b16 %v276
        %v920 = vunpack.c.l.b16 %v277
        %v921 = vunpack.c.l.b16 %v278
        %v922 = vunpack.c.l.b16 %v279
        %v923 = vpack.c.b16 %v892, %v891
        %v924 = vpack.c.b16 %v894, %v893
        %v925 = vpack.c.b16 %v896, %v895
        %v926 = vpack.c.b16 %v898, %v897
        %v927 = vpack.c.b16 %v900, %v899
        %v928 = vpack.c.b16 %v902, %v901
        %v929 = vpack.c.b16 %v904, %v903
        %v930 = vpack.c.b16 %v906, %v905
        %v931 = vpack.c.b16 %v908, %v907
        %v932 = vpack.c.b16 %v910, %v909
        %v933 = vpack.c.b16 %v912, %v911
        %v934 = vpack.c.b16 %v914, %v913
        %v935 = vpack.c.b16 %v916, %v915
        %v936 = vpack.c.b16 %v918, %v917
        %v937 = vpack.c.b16 %v920, %v919
        %v938 = vpack.c.b16 %v922, %v921
        %939 = vrot.lane.b32.xlu0 %v923, 12
        %v940 = vpop.permute.xlu0 %939
        %941 = vrot.lane.b32.xlu0 %v924, 12
        %v942 = vpop.permute.xlu0 %941
        %943 = vrot.lane.b32.xlu0 %v925, 12
        %v944 = vpop.permute.xlu0 %943
        %945 = vrot.lane.b32.xlu0 %v926, 12
        %v946 = vpop.permute.xlu0 %945
        %947 = vrot.lane.b32.xlu0 %v927, 12
        %v948 = vpop.permute.xlu0 %947
        %949 = vrot.lane.b32.xlu0 %v928, 12
        %v950 = vpop.permute.xlu0 %949
        %951 = vrot.lane.b32.xlu0 %v929, 12
        %v952 = vpop.permute.xlu0 %951
        %953 = vrot.lane.b32.xlu0 %v930, 12
        %v954 = vpop.permute.xlu0 %953
        %955 = vrot.lane.b32.xlu0 %v931, 12
        %v956 = vpop.permute.xlu0 %955
        %957 = vrot.lane.b32.xlu0 %v932, 12
        %v958 = vpop.permute.xlu0 %957
        %959 = vrot.lane.b32.xlu0 %v933, 12
        %v960 = vpop.permute.xlu0 %959
        %961 = vrot.lane.b32.xlu0 %v934, 12
        %v962 = vpop.permute.xlu0 %961
        %963 = vrot.lane.b32.xlu0 %v935, 12
        %v964 = vpop.permute.xlu0 %963
        %965 = vrot.lane.b32.xlu0 %v936, 12
        %v966 = vpop.permute.xlu0 %965
        %967 = vrot.lane.b32.xlu0 %v937, 12
        %v968 = vpop.permute.xlu0 %967
        %969 = vrot.lane.b32.xlu0 %v938, 12
        %v970 = vpop.permute.xlu0 %969
        %v987 = vunpack.c.l.b16 %v280
        %v988 = vunpack.c.l.b16 %v281
        %v989 = vunpack.c.l.b16 %v282
        %v990 = vunpack.c.l.b16 %v283
        %v991 = vunpack.c.l.b16 %v284
        %v992 = vunpack.c.l.b16 %v285
        %v993 = vunpack.c.l.b16 %v286
        %v994 = vunpack.c.l.b16 %v287
        %v995 = vunpack.c.l.b16 %v288
        %v996 = vunpack.c.l.b16 %v289
        %v997 = vunpack.c.l.b16 %v290
        %v998 = vunpack.c.l.b16 %v291
        %v999 = vunpack.c.l.b16 %v292
        %v1000 = vunpack.c.l.b16 %v293
        %v1001 = vunpack.c.l.b16 %v294
        %v1002 = vunpack.c.l.b16 %v295
        %v1003 = vpack.c.b16 %v987, %v987
        %v1004 = vpack.c.b16 %v988, %v988
        %v1005 = vpack.c.b16 %v989, %v989
        %v1006 = vpack.c.b16 %v990, %v990
        %v1007 = vpack.c.b16 %v991, %v991
        %v1008 = vpack.c.b16 %v992, %v992
        %v1009 = vpack.c.b16 %v993, %v993
        %v1010 = vpack.c.b16 %v994, %v994
        %v1011 = vpack.c.b16 %v995, %v995
        %v1012 = vpack.c.b16 %v996, %v996
        %v1013 = vpack.c.b16 %v997, %v997
        %v1014 = vpack.c.b16 %v998, %v998
        %v1015 = vpack.c.b16 %v999, %v999
        %v1016 = vpack.c.b16 %v1000, %v1000
        %v1017 = vpack.c.b16 %v1001, %v1001
        %v1018 = vpack.c.b16 %v1002, %v1002
        %v1020 = vshrl.u32 %v923, 16
        %v1022 = vshll.u32 %v923, 16
        %v1024 = vrot.slane %v1022, 1
        %v1025 = vor.u32 %v1020, %v1024
        %v1027 = vshll.u32 %v1003, 16
        %v1029 = vrot.slane %v1027, 1
        %v1030 = vsel %vm505, %v1025, %v1029
        %v1032 = vshrl.u32 %v924, 16
        %v1034 = vshll.u32 %v924, 16
        %v1036 = vrot.slane %v1034, 1
        %v1037 = vor.u32 %v1032, %v1036
        %v1039 = vshll.u32 %v1004, 16
        %v1041 = vrot.slane %v1039, 1
        %v1042 = vsel %vm505, %v1037, %v1041
        %v1044 = vshrl.u32 %v925, 16
        %v1046 = vshll.u32 %v925, 16
        %v1048 = vrot.slane %v1046, 1
        %v1049 = vor.u32 %v1044, %v1048
        %v1051 = vshll.u32 %v1005, 16
        %v1053 = vrot.slane %v1051, 1
        %v1054 = vsel %vm505, %v1049, %v1053
        %v1056 = vshrl.u32 %v926, 16
        %v1058 = vshll.u32 %v926, 16
        %v1060 = vrot.slane %v1058, 1
        %v1061 = vor.u32 %v1056, %v1060
        %v1063 = vshll.u32 %v1006, 16
        %v1065 = vrot.slane %v1063, 1
        %v1066 = vsel %vm505, %v1061, %v1065
        %v1068 = vshrl.u32 %v927, 16
        %v1070 = vshll.u32 %v927, 16
        %v1072 = vrot.slane %v1070, 1
        %v1073 = vor.u32 %v1068, %v1072
        %v1075 = vshll.u32 %v1007, 16
        %v1077 = vrot.slane %v1075, 1
        %v1078 = vsel %vm505, %v1073, %v1077
        %v1080 = vshrl.u32 %v928, 16
        %v1082 = vshll.u32 %v928, 16
        %v1084 = vrot.slane %v1082, 1
        %v1085 = vor.u32 %v1080, %v1084
        %v1087 = vshll.u32 %v1008, 16
        %v1089 = vrot.slane %v1087, 1
        %v1090 = vsel %vm505, %v1085, %v1089
        %v1092 = vshrl.u32 %v929, 16
        %v1094 = vshll.u32 %v929, 16
        %v1096 = vrot.slane %v1094, 1
        %v1097 = vor.u32 %v1092, %v1096
        %v1099 = vshll.u32 %v1009, 16
        %v1101 = vrot.slane %v1099, 1
        %v1102 = vsel %vm505, %v1097, %v1101
        %v1104 = vshrl.u32 %v930, 16
        %v1106 = vshll.u32 %v930, 16
        %v1108 = vrot.slane %v1106, 1
        %v1109 = vor.u32 %v1104, %v1108
        %v1111 = vshll.u32 %v1010, 16
        %v1113 = vrot.slane %v1111, 1
        %v1114 = vsel %vm505, %v1109, %v1113
        %v1116 = vshrl.u32 %v931, 16
        %v1118 = vshll.u32 %v931, 16
        %v1120 = vrot.slane %v1118, 1
        %v1121 = vor.u32 %v1116, %v1120
        %v1123 = vshll.u32 %v1011, 16
        %v1125 = vrot.slane %v1123, 1
        %v1126 = vsel %vm505, %v1121, %v1125
        %v1128 = vshrl.u32 %v932, 16
        %v1130 = vshll.u32 %v932, 16
        %v1132 = vrot.slane %v1130, 1
        %v1133 = vor.u32 %v1128, %v1132
        %v1135 = vshll.u32 %v1012, 16
        %v1137 = vrot.slane %v1135, 1
        %v1138 = vsel %vm505, %v1133, %v1137
        %v1140 = vshrl.u32 %v933, 16
        %v1142 = vshll.u32 %v933, 16
        %v1144 = vrot.slane %v1142, 1
        %v1145 = vor.u32 %v1140, %v1144
        %v1147 = vshll.u32 %v1013, 16
        %v1149 = vrot.slane %v1147, 1
        %v1150 = vsel %vm505, %v1145, %v1149
        %v1152 = vshrl.u32 %v934, 16
        %v1154 = vshll.u32 %v934, 16
        %v1156 = vrot.slane %v1154, 1
        %v1157 = vor.u32 %v1152, %v1156
        %v1159 = vshll.u32 %v1014, 16
        %v1161 = vrot.slane %v1159, 1
        %v1162 = vsel %vm505, %v1157, %v1161
        %v1164 = vshrl.u32 %v935, 16
        %v1166 = vshll.u32 %v935, 16
        %v1168 = vrot.slane %v1166, 1
        %v1169 = vor.u32 %v1164, %v1168
        %v1171 = vshll.u32 %v1015, 16
        %v1173 = vrot.slane %v1171, 1
        %v1174 = vsel %vm505, %v1169, %v1173
        %v1176 = vshrl.u32 %v936, 16
        %v1178 = vshll.u32 %v936, 16
        %v1180 = vrot.slane %v1178, 1
        %v1181 = vor.u32 %v1176, %v1180
        %v1183 = vshll.u32 %v1016, 16
        %v1185 = vrot.slane %v1183, 1
        %v1186 = vsel %vm505, %v1181, %v1185
        %v1188 = vshrl.u32 %v937, 16
        %v1190 = vshll.u32 %v937, 16
        %v1192 = vrot.slane %v1190, 1
        %v1193 = vor.u32 %v1188, %v1192
        %v1195 = vshll.u32 %v1017, 16
        %v1197 = vrot.slane %v1195, 1
        %v1198 = vsel %vm505, %v1193, %v1197
        %v1200 = vshrl.u32 %v938, 16
        %v1202 = vshll.u32 %v938, 16
        %v1204 = vrot.slane %v1202, 1
        %v1205 = vor.u32 %v1200, %v1204
        %v1207 = vshll.u32 %v1018, 16
        %v1209 = vrot.slane %v1207, 1
        %v1210 = vsel %vm505, %v1205, %v1209
        %1211 = vrot.lane.b32.xlu0 %v1030, 16
        %v1212 = vpop.permute.xlu0 %1211
        %1213 = vrot.lane.b32.xlu0 %v1042, 16
        %v1214 = vpop.permute.xlu0 %1213
        %1215 = vrot.lane.b32.xlu0 %v1054, 16
        %v1216 = vpop.permute.xlu0 %1215
        %1217 = vrot.lane.b32.xlu0 %v1066, 16
        %v1218 = vpop.permute.xlu0 %1217
        %1219 = vrot.lane.b32.xlu0 %v1078, 16
        %v1220 = vpop.permute.xlu0 %1219
        %1221 = vrot.lane.b32.xlu0 %v1090, 16
        %v1222 = vpop.permute.xlu0 %1221
        %1223 = vrot.lane.b32.xlu0 %v1102, 16
        %v1224 = vpop.permute.xlu0 %1223
        %1225 = vrot.lane.b32.xlu0 %v1114, 16
        %v1226 = vpop.permute.xlu0 %1225
        %1227 = vrot.lane.b32.xlu0 %v1126, 16
        %v1228 = vpop.permute.xlu0 %1227
        %1229 = vrot.lane.b32.xlu0 %v1138, 16
        %v1230 = vpop.permute.xlu0 %1229
        %1231 = vrot.lane.b32.xlu0 %v1150, 16
        %v1232 = vpop.permute.xlu0 %1231
        %1233 = vrot.lane.b32.xlu0 %v1162, 16
        %v1234 = vpop.permute.xlu0 %1233
        %1235 = vrot.lane.b32.xlu0 %v1174, 16
        %v1236 = vpop.permute.xlu0 %1235
        %1237 = vrot.lane.b32.xlu0 %v1186, 16
        %v1238 = vpop.permute.xlu0 %1237
        %1239 = vrot.lane.b32.xlu0 %v1198, 16
        %v1240 = vpop.permute.xlu0 %1239
        %1241 = vrot.lane.b32.xlu0 %v1210, 16
        %v1242 = vpop.permute.xlu0 %1241
        %v1259 = vunpack.c.l.b16 %v296
        %v1260 = vunpack.c.l.b16 %v297
        %v1261 = vunpack.c.l.b16 %v298
        %v1262 = vunpack.c.l.b16 %v299
        %v1263 = vunpack.c.l.b16 %v300
        %v1264 = vunpack.c.l.b16 %v301
        %v1265 = vunpack.c.l.b16 %v302
        %v1266 = vunpack.c.l.b16 %v303
        %v1267 = vunpack.c.l.b16 %v304
        %v1268 = vunpack.c.l.b16 %v305
        %v1269 = vunpack.c.l.b16 %v306
        %v1270 = vunpack.c.l.b16 %v307
        %v1271 = vunpack.c.l.b16 %v308
        %v1272 = vunpack.c.l.b16 %v309
        %v1273 = vunpack.c.l.b16 %v310
        %v1274 = vunpack.c.l.b16 %v311
        %v1275 = vpack.c.b16 %v892, %v1259
        %v1276 = vpack.c.b16 %v894, %v1260
        %v1277 = vpack.c.b16 %v896, %v1261
        %v1278 = vpack.c.b16 %v898, %v1262
        %v1279 = vpack.c.b16 %v900, %v1263
        %v1280 = vpack.c.b16 %v902, %v1264
        %v1281 = vpack.c.b16 %v904, %v1265
        %v1282 = vpack.c.b16 %v906, %v1266
        %v1283 = vpack.c.b16 %v908, %v1267
        %v1284 = vpack.c.b16 %v910, %v1268
        %v1285 = vpack.c.b16 %v912, %v1269
        %v1286 = vpack.c.b16 %v914, %v1270
        %v1287 = vpack.c.b16 %v916, %v1271
        %v1288 = vpack.c.b16 %v918, %v1272
        %v1289 = vpack.c.b16 %v920, %v1273
        %v1290 = vpack.c.b16 %v922, %v1274
        %v1291 = vrot.slane %v1275, 1
        %v1292 = vrot.slane %v1003, 1
        %v1293 = vsel %vm778, %v1291, %v1292
        %v1294 = vrot.slane %v1276, 1
        %v1295 = vrot.slane %v1004, 1
        %v1296 = vsel %vm778, %v1294, %v1295
        %v1297 = vrot.slane %v1277, 1
        %v1298 = vrot.slane %v1005, 1
        %v1299 = vsel %vm778, %v1297, %v1298
        %v1300 = vrot.slane %v1278, 1
        %v1301 = vrot.slane %v1006, 1
        %v1302 = vsel %vm778, %v1300, %v1301
        %v1303 = vrot.slane %v1279, 1
        %v1304 = vrot.slane %v1007, 1
        %v1305 = vsel %vm778, %v1303, %v1304
        %v1306 = vrot.slane %v1280, 1
        %v1307 = vrot.slane %v1008, 1
        %v1308 = vsel %vm778, %v1306, %v1307
        %v1309 = vrot.slane %v1281, 1
        %v1310 = vrot.slane %v1009, 1
        %v1311 = vsel %vm778, %v1309, %v1310
        %v1312 = vrot.slane %v1282, 1
        %v1313 = vrot.slane %v1010, 1
        %v1314 = vsel %vm778, %v1312, %v1313
        %v1315 = vrot.slane %v1283, 1
        %v1316 = vrot.slane %v1011, 1
        %v1317 = vsel %vm778, %v1315, %v1316
        %v1318 = vrot.slane %v1284, 1
        %v1319 = vrot.slane %v1012, 1
        %v1320 = vsel %vm778, %v1318, %v1319
        %v1321 = vrot.slane %v1285, 1
        %v1322 = vrot.slane %v1013, 1
        %v1323 = vsel %vm778, %v1321, %v1322
        %v1324 = vrot.slane %v1286, 1
        %v1325 = vrot.slane %v1014, 1
        %v1326 = vsel %vm778, %v1324, %v1325
        %v1327 = vrot.slane %v1287, 1
        %v1328 = vrot.slane %v1015, 1
        %v1329 = vsel %vm778, %v1327, %v1328
        %v1330 = vrot.slane %v1288, 1
        %v1331 = vrot.slane %v1016, 1
        %v1332 = vsel %vm778, %v1330, %v1331
        %v1333 = vrot.slane %v1289, 1
        %v1334 = vrot.slane %v1017, 1
        %v1335 = vsel %vm778, %v1333, %v1334
        %v1336 = vrot.slane %v1290, 1
        %v1337 = vrot.slane %v1018, 1
        %v1338 = vsel %vm778, %v1336, %v1337
        %1339 = vrot.lane.b32.xlu0 %v1293, 20
        %v1340 = vpop.permute.xlu0 %1339
        %1341 = vrot.lane.b32.xlu0 %v1296, 20
        %v1342 = vpop.permute.xlu0 %1341
        %1343 = vrot.lane.b32.xlu0 %v1299, 20
        %v1344 = vpop.permute.xlu0 %1343
        %1345 = vrot.lane.b32.xlu0 %v1302, 20
        %v1346 = vpop.permute.xlu0 %1345
        %1347 = vrot.lane.b32.xlu0 %v1305, 20
        %v1348 = vpop.permute.xlu0 %1347
        %1349 = vrot.lane.b32.xlu0 %v1308, 20
        %v1350 = vpop.permute.xlu0 %1349
        %1351 = vrot.lane.b32.xlu0 %v1311, 20
        %v1352 = vpop.permute.xlu0 %1351
        %1353 = vrot.lane.b32.xlu0 %v1314, 20
        %v1354 = vpop.permute.xlu0 %1353
        %1355 = vrot.lane.b32.xlu0 %v1317, 20
        %v1356 = vpop.permute.xlu0 %1355
        %1357 = vrot.lane.b32.xlu0 %v1320, 20
        %v1358 = vpop.permute.xlu0 %1357
        %1359 = vrot.lane.b32.xlu0 %v1323, 20
        %v1360 = vpop.permute.xlu0 %1359
        %1361 = vrot.lane.b32.xlu0 %v1326, 20
        %v1362 = vpop.permute.xlu0 %1361
        %1363 = vrot.lane.b32.xlu0 %v1329, 20
        %v1364 = vpop.permute.xlu0 %1363
        %1365 = vrot.lane.b32.xlu0 %v1332, 20
        %v1366 = vpop.permute.xlu0 %1365
        %1367 = vrot.lane.b32.xlu0 %v1335, 20
        %v1368 = vpop.permute.xlu0 %1367
        %1369 = vrot.lane.b32.xlu0 %v1338, 20
        %v1370 = vpop.permute.xlu0 %1369
        %v1403 = vunpack.c.l.b16 %v313
        %v1404 = vunpack.c.l.b16 %v314
        %v1405 = vunpack.c.l.b16 %v315
        %v1406 = vunpack.c.l.b16 %v316
        %v1407 = vunpack.c.l.b16 %v317
        %v1408 = vunpack.c.l.b16 %v318
        %v1409 = vunpack.c.l.b16 %v319
        %v1410 = vunpack.c.l.b16 %v320
        %v1411 = vunpack.c.l.b16 %v321
        %v1412 = vunpack.c.l.b16 %v322
        %v1413 = vunpack.c.l.b16 %v323
        %v1414 = vunpack.c.l.b16 %v324
        %v1415 = vunpack.c.l.b16 %v325
        %v1416 = vunpack.c.l.b16 %v326
        %v1417 = vunpack.c.l.b16 %v327
        %v1418 = vunpack.c.l.b16 %v328
        %v1419 = vunpack.c.l.b16 %v329
        %v1420 = vunpack.c.l.b16 %v330
        %v1421 = vunpack.c.l.b16 %v331
        %v1422 = vunpack.c.l.b16 %v332
        %v1423 = vunpack.c.l.b16 %v333
        %v1424 = vunpack.c.l.b16 %v334
        %v1425 = vunpack.c.l.b16 %v335
        %v1426 = vunpack.c.l.b16 %v336
        %v1427 = vunpack.c.l.b16 %v337
        %v1428 = vunpack.c.l.b16 %v338
        %v1429 = vunpack.c.l.b16 %v339
        %v1430 = vunpack.c.l.b16 %v340
        %v1431 = vunpack.c.l.b16 %v341
        %v1432 = vunpack.c.l.b16 %v342
        %v1433 = vunpack.c.l.b16 %v343
        %v1434 = vunpack.c.l.b16 %v344
        %v1435 = vpack.c.b16 %v1404, %v1403
        %v1436 = vpack.c.b16 %v1406, %v1405
        %v1437 = vpack.c.b16 %v1408, %v1407
        %v1438 = vpack.c.b16 %v1410, %v1409
        %v1439 = vpack.c.b16 %v1412, %v1411
        %v1440 = vpack.c.b16 %v1414, %v1413
        %v1441 = vpack.c.b16 %v1416, %v1415
        %v1442 = vpack.c.b16 %v1418, %v1417
        %v1443 = vpack.c.b16 %v1420, %v1419
        %v1444 = vpack.c.b16 %v1422, %v1421
        %v1445 = vpack.c.b16 %v1424, %v1423
        %v1446 = vpack.c.b16 %v1426, %v1425
        %v1447 = vpack.c.b16 %v1428, %v1427
        %v1448 = vpack.c.b16 %v1430, %v1429
        %v1449 = vpack.c.b16 %v1432, %v1431
        %v1450 = vpack.c.b16 %v1434, %v1433
        %1451 = vrot.lane.b32.xlu0 %v1435, 24
        %v1452 = vpop.permute.xlu0 %1451
        %1453 = vrot.lane.b32.xlu0 %v1436, 24
        %v1454 = vpop.permute.xlu0 %1453
        %1455 = vrot.lane.b32.xlu0 %v1437, 24
        %v1456 = vpop.permute.xlu0 %1455
        %1457 = vrot.lane.b32.xlu0 %v1438, 24
        %v1458 = vpop.permute.xlu0 %1457
        %1459 = vrot.lane.b32.xlu0 %v1439, 24
        %v1460 = vpop.permute.xlu0 %1459
        %1461 = vrot.lane.b32.xlu0 %v1440, 24
        %v1462 = vpop.permute.xlu0 %1461
        %1463 = vrot.lane.b32.xlu0 %v1441, 24
        %v1464 = vpop.permute.xlu0 %1463
        %1465 = vrot.lane.b32.xlu0 %v1442, 24
        %v1466 = vpop.permute.xlu0 %1465
        %1467 = vrot.lane.b32.xlu0 %v1443, 24
        %v1468 = vpop.permute.xlu0 %1467
        %1469 = vrot.lane.b32.xlu0 %v1444, 24
        %v1470 = vpop.permute.xlu0 %1469
        %1471 = vrot.lane.b32.xlu0 %v1445, 24
        %v1472 = vpop.permute.xlu0 %1471
        %1473 = vrot.lane.b32.xlu0 %v1446, 24
        %v1474 = vpop.permute.xlu0 %1473
        %1475 = vrot.lane.b32.xlu0 %v1447, 24
        %v1476 = vpop.permute.xlu0 %1475
        %1477 = vrot.lane.b32.xlu0 %v1448, 24
        %v1478 = vpop.permute.xlu0 %1477
        %1479 = vrot.lane.b32.xlu0 %v1449, 24
        %v1480 = vpop.permute.xlu0 %1479
        %1481 = vrot.lane.b32.xlu0 %v1450, 24
        %v1482 = vpop.permute.xlu0 %1481
        %v1499 = vunpack.c.l.b16 %v345
        %v1500 = vunpack.c.l.b16 %v346
        %v1501 = vunpack.c.l.b16 %v347
        %v1502 = vunpack.c.l.b16 %v348
        %v1503 = vunpack.c.l.b16 %v349
        %v1504 = vunpack.c.l.b16 %v350
        %v1505 = vunpack.c.l.b16 %v351
        %v1506 = vunpack.c.l.b16 %v352
        %v1507 = vunpack.c.l.b16 %v353
        %v1508 = vunpack.c.l.b16 %v354
        %v1509 = vunpack.c.l.b16 %v355
        %v1510 = vunpack.c.l.b16 %v356
        %v1511 = vunpack.c.l.b16 %v357
        %v1512 = vunpack.c.l.b16 %v358
        %v1513 = vunpack.c.l.b16 %v359
        %v1514 = vunpack.c.l.b16 %v360
        %v1515 = vpack.c.b16 %v1499, %v1499
        %v1516 = vpack.c.b16 %v1500, %v1500
        %v1517 = vpack.c.b16 %v1501, %v1501
        %v1518 = vpack.c.b16 %v1502, %v1502
        %v1519 = vpack.c.b16 %v1503, %v1503
        %v1520 = vpack.c.b16 %v1504, %v1504
        %v1521 = vpack.c.b16 %v1505, %v1505
        %v1522 = vpack.c.b16 %v1506, %v1506
        %v1523 = vpack.c.b16 %v1507, %v1507
        %v1524 = vpack.c.b16 %v1508, %v1508
        %v1525 = vpack.c.b16 %v1509, %v1509
        %v1526 = vpack.c.b16 %v1510, %v1510
        %v1527 = vpack.c.b16 %v1511, %v1511
        %v1528 = vpack.c.b16 %v1512, %v1512
        %v1529 = vpack.c.b16 %v1513, %v1513
        %v1530 = vpack.c.b16 %v1514, %v1514
        %v1532 = vshrl.u32 %v1435, 16
        %v1534 = vshll.u32 %v1435, 16
        %v1536 = vrot.slane %v1534, 1
        %v1537 = vor.u32 %v1532, %v1536
        %v1539 = vshll.u32 %v1515, 16
        %v1541 = vrot.slane %v1539, 1
        %v1542 = vsel %vm505, %v1537, %v1541
        %v1544 = vshrl.u32 %v1436, 16
        %v1546 = vshll.u32 %v1436, 16
        %v1548 = vrot.slane %v1546, 1
        %v1549 = vor.u32 %v1544, %v1548
        %v1551 = vshll.u32 %v1516, 16
        %v1553 = vrot.slane %v1551, 1
        %v1554 = vsel %vm505, %v1549, %v1553
        %v1556 = vshrl.u32 %v1437, 16
        %v1558 = vshll.u32 %v1437, 16
        %v1560 = vrot.slane %v1558, 1
        %v1561 = vor.u32 %v1556, %v1560
        %v1563 = vshll.u32 %v1517, 16
        %v1565 = vrot.slane %v1563, 1
        %v1566 = vsel %vm505, %v1561, %v1565
        %v1568 = vshrl.u32 %v1438, 16
        %v1570 = vshll.u32 %v1438, 16
        %v1572 = vrot.slane %v1570, 1
        %v1573 = vor.u32 %v1568, %v1572
        %v1575 = vshll.u32 %v1518, 16
        %v1577 = vrot.slane %v1575, 1
        %v1578 = vsel %vm505, %v1573, %v1577
        %v1580 = vshrl.u32 %v1439, 16
        %v1582 = vshll.u32 %v1439, 16
        %v1584 = vrot.slane %v1582, 1
        %v1585 = vor.u32 %v1580, %v1584
        %v1587 = vshll.u32 %v1519, 16
        %v1589 = vrot.slane %v1587, 1
        %v1590 = vsel %vm505, %v1585, %v1589
        %v1592 = vshrl.u32 %v1440, 16
        %v1594 = vshll.u32 %v1440, 16
        %v1596 = vrot.slane %v1594, 1
        %v1597 = vor.u32 %v1592, %v1596
        %v1599 = vshll.u32 %v1520, 16
        %v1601 = vrot.slane %v1599, 1
        %v1602 = vsel %vm505, %v1597, %v1601
        %v1604 = vshrl.u32 %v1441, 16
        %v1606 = vshll.u32 %v1441, 16
        %v1608 = vrot.slane %v1606, 1
        %v1609 = vor.u32 %v1604, %v1608
        %v1611 = vshll.u32 %v1521, 16
        %v1613 = vrot.slane %v1611, 1
        %v1614 = vsel %vm505, %v1609, %v1613
        %v1616 = vshrl.u32 %v1442, 16
        %v1618 = vshll.u32 %v1442, 16
        %v1620 = vrot.slane %v1618, 1
        %v1621 = vor.u32 %v1616, %v1620
        %v1623 = vshll.u32 %v1522, 16
        %v1625 = vrot.slane %v1623, 1
        %v1626 = vsel %vm505, %v1621, %v1625
        %v1628 = vshrl.u32 %v1443, 16
        %v1630 = vshll.u32 %v1443, 16
        %v1632 = vrot.slane %v1630, 1
        %v1633 = vor.u32 %v1628, %v1632
        %v1635 = vshll.u32 %v1523, 16
        %v1637 = vrot.slane %v1635, 1
        %v1638 = vsel %vm505, %v1633, %v1637
        %v1640 = vshrl.u32 %v1444, 16
        %v1642 = vshll.u32 %v1444, 16
        %v1644 = vrot.slane %v1642, 1
        %v1645 = vor.u32 %v1640, %v1644
        %v1647 = vshll.u32 %v1524, 16
        %v1649 = vrot.slane %v1647, 1
        %v1650 = vsel %vm505, %v1645, %v1649
        %v1652 = vshrl.u32 %v1445, 16
        %v1654 = vshll.u32 %v1445, 16
        %v1656 = vrot.slane %v1654, 1
        %v1657 = vor.u32 %v1652, %v1656
        %v1659 = vshll.u32 %v1525, 16
        %v1661 = vrot.slane %v1659, 1
        %v1662 = vsel %vm505, %v1657, %v1661
        %v1664 = vshrl.u32 %v1446, 16
        %v1666 = vshll.u32 %v1446, 16
        %v1668 = vrot.slane %v1666, 1
        %v1669 = vor.u32 %v1664, %v1668
        %v1671 = vshll.u32 %v1526, 16
        %v1673 = vrot.slane %v1671, 1
        %v1674 = vsel %vm505, %v1669, %v1673
        %v1676 = vshrl.u32 %v1447, 16
        %v1678 = vshll.u32 %v1447, 16
        %v1680 = vrot.slane %v1678, 1
        %v1681 = vor.u32 %v1676, %v1680
        %v1683 = vshll.u32 %v1527, 16
        %v1685 = vrot.slane %v1683, 1
        %v1686 = vsel %vm505, %v1681, %v1685
        %v1688 = vshrl.u32 %v1448, 16
        %v1690 = vshll.u32 %v1448, 16
        %v1692 = vrot.slane %v1690, 1
        %v1693 = vor.u32 %v1688, %v1692
        %v1695 = vshll.u32 %v1528, 16
        %v1697 = vrot.slane %v1695, 1
        %v1698 = vsel %vm505, %v1693, %v1697
        %v1700 = vshrl.u32 %v1449, 16
        %v1702 = vshll.u32 %v1449, 16
        %v1704 = vrot.slane %v1702, 1
        %v1705 = vor.u32 %v1700, %v1704
        %v1707 = vshll.u32 %v1529, 16
        %v1709 = vrot.slane %v1707, 1
        %v1710 = vsel %vm505, %v1705, %v1709
        %v1712 = vshrl.u32 %v1450, 16
        %v1714 = vshll.u32 %v1450, 16
        %v1716 = vrot.slane %v1714, 1
        %v1717 = vor.u32 %v1712, %v1716
        %v1719 = vshll.u32 %v1530, 16
        %v1721 = vrot.slane %v1719, 1
        %v1722 = vsel %vm505, %v1717, %v1721
        %1723 = vrot.lane.b32.xlu0 %v1542, 28
        %v1724 = vpop.permute.xlu0 %1723
        %1725 = vrot.lane.b32.xlu0 %v1554, 28
        %v1726 = vpop.permute.xlu0 %1725
        %1727 = vrot.lane.b32.xlu0 %v1566, 28
        %v1728 = vpop.permute.xlu0 %1727
        %1729 = vrot.lane.b32.xlu0 %v1578, 28
        %v1730 = vpop.permute.xlu0 %1729
        %1731 = vrot.lane.b32.xlu0 %v1590, 28
        %v1732 = vpop.permute.xlu0 %1731
        %1733 = vrot.lane.b32.xlu0 %v1602, 28
        %v1734 = vpop.permute.xlu0 %1733
        %1735 = vrot.lane.b32.xlu0 %v1614, 28
        %v1736 = vpop.permute.xlu0 %1735
        %1737 = vrot.lane.b32.xlu0 %v1626, 28
        %v1738 = vpop.permute.xlu0 %1737
        %1739 = vrot.lane.b32.xlu0 %v1638, 28
        %v1740 = vpop.permute.xlu0 %1739
        %1741 = vrot.lane.b32.xlu0 %v1650, 28
        %v1742 = vpop.permute.xlu0 %1741
        %1743 = vrot.lane.b32.xlu0 %v1662, 28
        %v1744 = vpop.permute.xlu0 %1743
        %1745 = vrot.lane.b32.xlu0 %v1674, 28
        %v1746 = vpop.permute.xlu0 %1745
        %1747 = vrot.lane.b32.xlu0 %v1686, 28
        %v1748 = vpop.permute.xlu0 %1747
        %1749 = vrot.lane.b32.xlu0 %v1698, 28
        %v1750 = vpop.permute.xlu0 %1749
        %1751 = vrot.lane.b32.xlu0 %v1710, 28
        %v1752 = vpop.permute.xlu0 %1751
        %1753 = vrot.lane.b32.xlu0 %v1722, 28
        %v1754 = vpop.permute.xlu0 %1753
        %v1771 = vunpack.c.l.b16 %v361
        %v1772 = vunpack.c.l.b16 %v362
        %v1773 = vunpack.c.l.b16 %v363
        %v1774 = vunpack.c.l.b16 %v364
        %v1775 = vunpack.c.l.b16 %v365
        %v1776 = vunpack.c.l.b16 %v366
        %v1777 = vunpack.c.l.b16 %v367
        %v1778 = vunpack.c.l.b16 %v368
        %v1779 = vunpack.c.l.b16 %v369
        %v1780 = vunpack.c.l.b16 %v370
        %v1781 = vunpack.c.l.b16 %v371
        %v1782 = vunpack.c.l.b16 %v372
        %v1783 = vunpack.c.l.b16 %v373
        %v1784 = vunpack.c.l.b16 %v374
        %v1785 = vunpack.c.l.b16 %v375
        %v1786 = vunpack.c.l.b16 %v376
        %v1787 = vpack.c.b16 %v1404, %v1771
        %v1788 = vpack.c.b16 %v1406, %v1772
        %v1789 = vpack.c.b16 %v1408, %v1773
        %v1790 = vpack.c.b16 %v1410, %v1774
        %v1791 = vpack.c.b16 %v1412, %v1775
        %v1792 = vpack.c.b16 %v1414, %v1776
        %v1793 = vpack.c.b16 %v1416, %v1777
        %v1794 = vpack.c.b16 %v1418, %v1778
        %v1795 = vpack.c.b16 %v1420, %v1779
        %v1796 = vpack.c.b16 %v1422, %v1780
        %v1797 = vpack.c.b16 %v1424, %v1781
        %v1798 = vpack.c.b16 %v1426, %v1782
        %v1799 = vpack.c.b16 %v1428, %v1783
        %v1800 = vpack.c.b16 %v1430, %v1784
        %v1801 = vpack.c.b16 %v1432, %v1785
        %v1802 = vpack.c.b16 %v1434, %v1786
        %v1803 = vrot.slane %v1787, 1
        %v1804 = vrot.slane %v1515, 1
        %v1805 = vsel %vm778, %v1803, %v1804
        %v1806 = vrot.slane %v1788, 1
        %v1807 = vrot.slane %v1516, 1
        %v1808 = vsel %vm778, %v1806, %v1807
        %v1809 = vrot.slane %v1789, 1
        %v1810 = vrot.slane %v1517, 1
        %v1811 = vsel %vm778, %v1809, %v1810
        %v1812 = vrot.slane %v1790, 1
        %v1813 = vrot.slane %v1518, 1
        %v1814 = vsel %vm778, %v1812, %v1813
        %v1815 = vrot.slane %v1791, 1
        %v1816 = vrot.slane %v1519, 1
        %v1817 = vsel %vm778, %v1815, %v1816
        %v1818 = vrot.slane %v1792, 1
        %v1819 = vrot.slane %v1520, 1
        %v1820 = vsel %vm778, %v1818, %v1819
        %v1821 = vrot.slane %v1793, 1
        %v1822 = vrot.slane %v1521, 1
        %v1823 = vsel %vm778, %v1821, %v1822
        %v1824 = vrot.slane %v1794, 1
        %v1825 = vrot.slane %v1522, 1
        %v1826 = vsel %vm778, %v1824, %v1825
        %v1827 = vrot.slane %v1795, 1
        %v1828 = vrot.slane %v1523, 1
        %v1829 = vsel %vm778, %v1827, %v1828
        %v1830 = vrot.slane %v1796, 1
        %v1831 = vrot.slane %v1524, 1
        %v1832 = vsel %vm778, %v1830, %v1831
        %v1833 = vrot.slane %v1797, 1
        %v1834 = vrot.slane %v1525, 1
        %v1835 = vsel %vm778, %v1833, %v1834
        %v1836 = vrot.slane %v1798, 1
        %v1837 = vrot.slane %v1526, 1
        %v1838 = vsel %vm778, %v1836, %v1837
        %v1839 = vrot.slane %v1799, 1
        %v1840 = vrot.slane %v1527, 1
        %v1841 = vsel %vm778, %v1839, %v1840
        %v1842 = vrot.slane %v1800, 1
        %v1843 = vrot.slane %v1528, 1
        %v1844 = vsel %vm778, %v1842, %v1843
        %v1845 = vrot.slane %v1801, 1
        %v1846 = vrot.slane %v1529, 1
        %v1847 = vsel %vm778, %v1845, %v1846
        %v1848 = vrot.slane %v1802, 1
        %v1849 = vrot.slane %v1530, 1
        %v1850 = vsel %vm778, %v1848, %v1849
        %1851 = vrot.lane.b32.xlu0 %v1805, 32
        %v1852 = vpop.permute.xlu0 %1851
        %1853 = vrot.lane.b32.xlu0 %v1808, 32
        %v1854 = vpop.permute.xlu0 %1853
        %1855 = vrot.lane.b32.xlu0 %v1811, 32
        %v1856 = vpop.permute.xlu0 %1855
        %1857 = vrot.lane.b32.xlu0 %v1814, 32
        %v1858 = vpop.permute.xlu0 %1857
        %1859 = vrot.lane.b32.xlu0 %v1817, 32
        %v1860 = vpop.permute.xlu0 %1859
        %1861 = vrot.lane.b32.xlu0 %v1820, 32
        %v1862 = vpop.permute.xlu0 %1861
        %1863 = vrot.lane.b32.xlu0 %v1823, 32
        %v1864 = vpop.permute.xlu0 %1863
        %1865 = vrot.lane.b32.xlu0 %v1826, 32
        %v1866 = vpop.permute.xlu0 %1865
        %1867 = vrot.lane.b32.xlu0 %v1829, 32
        %v1868 = vpop.permute.xlu0 %1867
        %1869 = vrot.lane.b32.xlu0 %v1832, 32
        %v1870 = vpop.permute.xlu0 %1869
        %1871 = vrot.lane.b32.xlu0 %v1835, 32
        %v1872 = vpop.permute.xlu0 %1871
        %1873 = vrot.lane.b32.xlu0 %v1838, 32
        %v1874 = vpop.permute.xlu0 %1873
        %1875 = vrot.lane.b32.xlu0 %v1841, 32
        %v1876 = vpop.permute.xlu0 %1875
        %1877 = vrot.lane.b32.xlu0 %v1844, 32
        %v1878 = vpop.permute.xlu0 %1877
        %1879 = vrot.lane.b32.xlu0 %v1847, 32
        %v1880 = vpop.permute.xlu0 %1879
        %1881 = vrot.lane.b32.xlu0 %v1850, 32
        %v1882 = vpop.permute.xlu0 %1881
        %vm1883 = vcmask 31744
        %v1885 = vsel %vm1883, %v441, %v699
        %v1887 = vsel %vm1883, %v442, %v701
        %v1889 = vsel %vm1883, %v443, %v703
        %v1891 = vsel %vm1883, %v444, %v705
        %v1893 = vsel %vm1883, %v445, %v707
        %v1895 = vsel %vm1883, %v446, %v709
        %v1897 = vsel %vm1883, %v447, %v711
        %v1899 = vsel %vm1883, %v448, %v713
        %v1901 = vsel %vm1883, %v449, %v715
        %v1903 = vsel %vm1883, %v450, %v717
        %v1905 = vsel %vm1883, %v451, %v719
        %v1907 = vsel %vm1883, %v452, %v721
        %v1909 = vsel %vm1883, %v453, %v723
        %v1911 = vsel %vm1883, %v454, %v725
        %v1913 = vsel %vm1883, %v455, %v727
        %v1915 = vsel %vm1883, %v456, %v729
        %vm1916 = vcmask 64512
        %v1918 = vsel %vm1916, %v1885, %v828
        %v1920 = vsel %vm1916, %v1887, %v830
        %v1922 = vsel %vm1916, %v1889, %v832
        %v1924 = vsel %vm1916, %v1891, %v834
        %v1926 = vsel %vm1916, %v1893, %v836
        %v1928 = vsel %vm1916, %v1895, %v838
        %v1930 = vsel %vm1916, %v1897, %v840
        %v1932 = vsel %vm1916, %v1899, %v842
        %v1934 = vsel %vm1916, %v1901, %v844
        %v1936 = vsel %vm1916, %v1903, %v846
        %v1938 = vsel %vm1916, %v1905, %v848
        %v1940 = vsel %vm1916, %v1907, %v850
        %v1942 = vsel %vm1916, %v1909, %v852
        %v1944 = vsel %vm1916, %v1911, %v854
        %v1946 = vsel %vm1916, %v1913, %v856
        %v1948 = vsel %vm1916, %v1915, %v858
        %vm1949 = vcmask 97280
        %v1951 = vsel %vm1949, %v1918, %v940
        %v1953 = vsel %vm1949, %v1920, %v942
        %v1955 = vsel %vm1949, %v1922, %v944
        %v1957 = vsel %vm1949, %v1924, %v946
        %v1959 = vsel %vm1949, %v1926, %v948
        %v1961 = vsel %vm1949, %v1928, %v950
        %v1963 = vsel %vm1949, %v1930, %v952
        %v1965 = vsel %vm1949, %v1932, %v954
        %v1967 = vsel %vm1949, %v1934, %v956
        %v1969 = vsel %vm1949, %v1936, %v958
        %v1971 = vsel %vm1949, %v1938, %v960
        %v1973 = vsel %vm1949, %v1940, %v962
        %v1975 = vsel %vm1949, %v1942, %v964
        %v1977 = vsel %vm1949, %v1944, %v966
        %v1979 = vsel %vm1949, %v1946, %v968
        %v1981 = vsel %vm1949, %v1948, %v970
        %vm1982 = vcmask 130048
        %v1984 = vsel %vm1982, %v1951, %v1212
        %v1986 = vsel %vm1982, %v1953, %v1214
        %v1988 = vsel %vm1982, %v1955, %v1216
        %v1990 = vsel %vm1982, %v1957, %v1218
        %v1992 = vsel %vm1982, %v1959, %v1220
        %v1994 = vsel %vm1982, %v1961, %v1222
        %v1996 = vsel %vm1982, %v1963, %v1224
        %v1998 = vsel %vm1982, %v1965, %v1226
        %v2000 = vsel %vm1982, %v1967, %v1228
        %v2002 = vsel %vm1982, %v1969, %v1230
        %v2004 = vsel %vm1982, %v1971, %v1232
        %v2006 = vsel %vm1982, %v1973, %v1234
        %v2008 = vsel %vm1982, %v1975, %v1236
        %v2010 = vsel %vm1982, %v1977, %v1238
        %v2012 = vsel %vm1982, %v1979, %v1240
        %v2014 = vsel %vm1982, %v1981, %v1242
        %vm2015 = vcmask 162816
        %v2017 = vsel %vm2015, %v1984, %v1340
        %v2019 = vsel %vm2015, %v1986, %v1342
        %v2021 = vsel %vm2015, %v1988, %v1344
        %v2023 = vsel %vm2015, %v1990, %v1346
        %v2025 = vsel %vm2015, %v1992, %v1348
        %v2027 = vsel %vm2015, %v1994, %v1350
        %v2029 = vsel %vm2015, %v1996, %v1352
        %v2031 = vsel %vm2015, %v1998, %v1354
        %v2033 = vsel %vm2015, %v2000, %v1356
        %v2035 = vsel %vm2015, %v2002, %v1358
        %v2037 = vsel %vm2015, %v2004, %v1360
        %v2039 = vsel %vm2015, %v2006, %v1362
        %v2041 = vsel %vm2015, %v2008, %v1364
        %v2043 = vsel %vm2015, %v2010, %v1366
        %v2045 = vsel %vm2015, %v2012, %v1368
        %v2047 = vsel %vm2015, %v2014, %v1370
        %vm2048 = vcmask 195584
        %v2050 = vsel %vm2048, %v2017, %v1452
        %v2052 = vsel %vm2048, %v2019, %v1454
        %v2054 = vsel %vm2048, %v2021, %v1456
        %v2056 = vsel %vm2048, %v2023, %v1458
        %v2058 = vsel %vm2048, %v2025, %v1460
        %v2060 = vsel %vm2048, %v2027, %v1462
        %v2062 = vsel %vm2048, %v2029, %v1464
        %v2064 = vsel %vm2048, %v2031, %v1466
        %v2066 = vsel %vm2048, %v2033, %v1468
        %v2068 = vsel %vm2048, %v2035, %v1470
        %v2070 = vsel %vm2048, %v2037, %v1472
        %v2072 = vsel %vm2048, %v2039, %v1474
        %v2074 = vsel %vm2048, %v2041, %v1476
        %v2076 = vsel %vm2048, %v2043, %v1478
        %v2078 = vsel %vm2048, %v2045, %v1480
        %v2080 = vsel %vm2048, %v2047, %v1482
        %vm2081 = vcmask 228352
        %v2083 = vsel %vm2081, %v2050, %v1724
        %v2085 = vsel %vm2081, %v2052, %v1726
        %v2087 = vsel %vm2081, %v2054, %v1728
        %v2089 = vsel %vm2081, %v2056, %v1730
        %v2091 = vsel %vm2081, %v2058, %v1732
        %v2093 = vsel %vm2081, %v2060, %v1734
        %v2095 = vsel %vm2081, %v2062, %v1736
        %v2097 = vsel %vm2081, %v2064, %v1738
        %v2099 = vsel %vm2081, %v2066, %v1740
        %v2101 = vsel %vm2081, %v2068, %v1742
        %v2103 = vsel %vm2081, %v2070, %v1744
        %v2105 = vsel %vm2081, %v2072, %v1746
        %v2107 = vsel %vm2081, %v2074, %v1748
        %v2109 = vsel %vm2081, %v2076, %v1750
        %v2111 = vsel %vm2081, %v2078, %v1752
        %v2113 = vsel %vm2081, %v2080, %v1754
        %vm2114 = vcmask 261120
        %v2116 = vsel %vm2114, %v2083, %v1852
        %v2118 = vsel %vm2114, %v2085, %v1854
        %v2120 = vsel %vm2114, %v2087, %v1856
        %v2122 = vsel %vm2114, %v2089, %v1858
        %v2124 = vsel %vm2114, %v2091, %v1860
        %v2126 = vsel %vm2114, %v2093, %v1862
        %v2128 = vsel %vm2114, %v2095, %v1864
        %v2130 = vsel %vm2114, %v2097, %v1866
        %v2132 = vsel %vm2114, %v2099, %v1868
        %v2134 = vsel %vm2114, %v2101, %v1870
        %v2136 = vsel %vm2114, %v2103, %v1872
        %v2138 = vsel %vm2114, %v2105, %v1874
        %v2140 = vsel %vm2114, %v2107, %v1876
        %v2142 = vsel %vm2114, %v2109, %v1878
        %v2144 = vsel %vm2114, %v2111, %v1880
        %v2146 = vsel %vm2114, %v2113, %v1882
        %v2147 = vld [vmem:[%s1] sm:$0xf]
        %v2148 = vld [vmem:[%s1 + $0x4] sm:$0xf]
        %v2149 = vld [vmem:[%s1 + $0x8] sm:$0xf]
        %v2150 = vld [vmem:[%s1 + $0xc] sm:$0xf]
        %v2151 = vld [vmem:[%s1 + $0x10] sm:$0x3]
        %v2157 = vunpack.c.l.b16 %v2147
        %v2158 = vunpack.c.l.b16 %v2148
        %v2159 = vunpack.c.l.b16 %v2149
        %v2160 = vunpack.c.l.b16 %v2150
        %v2161 = vunpack.c.l.b16 %v2151
        %v2162 = vpack.c.b16 %v2158, %v2157
        %v2163 = vpack.c.b16 %v2160, %v2159
        %v2164 = vpack.c.b16 %v2161, %v2161
        %vm2167 = vcmask 293888
        %v2168 = vsel %vm2167, %v2116, 0
        %v2170 = vsel %vm2167, %v2118, 0
        %v2172 = vsel %vm2167, %v2120, 0
        %v2174 = vsel %vm2167, %v2122, 0
        %v2176 = vsel %vm2167, %v2124, 0
        %v2178 = vsel %vm2167, %v2126, 0
        %v2180 = vsel %vm2167, %v2128, 0
        %v2182 = vsel %vm2167, %v2130, 0
        %v2184 = vsel %vm2167, %v2132, 0
        %v2186 = vsel %vm2167, %v2134, 0
        %v2188 = vsel %vm2167, %v2136, 0
        %v2190 = vsel %vm2167, %v2138, 0
        %v2192 = vsel %vm2167, %v2140, 0
        %v2194 = vsel %vm2167, %v2142, 0
        %v2196 = vsel %vm2167, %v2144, 0
        %v2198 = vsel %vm2167, %v2146, 0
        %vm2200 = vcmask 1041408
        %v2202 = vsel %vm2200, %v2164, 0
        %2204 = vmatprep.subr.bf16.mxu0 0
        %2205 = vmatpush1.bf16.msra.mxu0 0
        %2206 = vmatprep.subr.bf16.mxu0 0
        %2207 = vmatpush1.bf16.msra.mxu0 0
        %2208 = vmatprep.subr.bf16.mxu0 0
        %2209 = vmatpush1.bf16.msra.mxu0 0
        %2210 = vmatprep.subr.bf16.mxu0 0
        %2211 = vmatpush1.bf16.msra.mxu0 0
        %2212 = vmatprep.subr.bf16.mxu0 0
        %2213 = vmatpush1.bf16.msra.mxu0 0
        %2214 = vmatprep.subr.bf16.mxu0 0
        %2215 = vmatpush1.bf16.msra.mxu0 %v2202
        %2216 = vmatprep.subr.bf16.mxu0 0
        %2217 = vmatpush1.bf16.msra.mxu0 %v2163
        %2218 = vmatprep.subr.bf16.mxu0 0
        %2219 = vmatpush1.bf16.msra.mxu0 %v2162
        %2220 = vmatprep.subr.bf16.mxu0 0
        %2221 = vmatpush2.bf16.msra.mxu0 0
        %2222 = vmatprep.subr.bf16.mxu0 0
        %2223 = vmatpush2.bf16.msra.mxu0 0
        %2224 = vmatprep.subr.bf16.mxu0 0
        %2225 = vmatpush2.bf16.msra.mxu0 0
        %2226 = vmatprep.subr.bf16.mxu0 0
        %2227 = vmatpush2.bf16.msra.mxu0 0
        %2228 = vmatprep.subr.bf16.mxu0 0
        %2229 = vmatpush2.bf16.msra.mxu0 0
        %2230 = vmatprep.subr.bf16.mxu0 0
        %2231 = vmatpush2.bf16.msra.mxu0 0
        %2232 = vmatprep.subr.bf16.mxu0 0
        %2233 = vmatpush2.bf16.msra.mxu0 0
        %2234 = vmatprep.subr.bf16.mxu0 0
        %2235 = vmatpush2.bf16.msra.mxu0 0
        %2236 = vmatprep.mubr.bf16.mxu0 0
        %2237 = vmatmul.mubr.bf16.gmra.mxu0 %v2168
        %v2238 = vpop.f32.mrf.mxu0
        %v2239 = vadd.f32 0.0, %v2238
        %v2240 = vpop.f32.mrf.mxu0
        %v2241 = vpop.f32.mrf.mxu0
        %v2242 = vadd.f32 0.0, %v2241
        %v2243 = vpop.f32.mrf.mxu0
        %2244 = vmatprep.mubr.bf16.mxu0 0
        %2245 = vmatmul.mubr.bf16.gmra.mxu0 %v2170
        %v2246 = vpop.f32.mrf.mxu0
        %v2247 = vadd.f32 0.0, %v2246
        %v2248 = vpop.f32.mrf.mxu0
        %v2249 = vpop.f32.mrf.mxu0
        %v2250 = vadd.f32 0.0, %v2249
        %v2251 = vpop.f32.mrf.mxu0
        %2252 = vmatprep.mubr.bf16.mxu0 0
        %2253 = vmatmul.mubr.bf16.gmra.mxu0 %v2172
        %v2254 = vpop.f32.mrf.mxu0
        %v2255 = vadd.f32 0.0, %v2254
        %v2256 = vpop.f32.mrf.mxu0
        %v2257 = vpop.f32.mrf.mxu0
        %v2258 = vadd.f32 0.0, %v2257
        %v2259 = vpop.f32.mrf.mxu0
        %2260 = vmatprep.mubr.bf16.mxu0 0
        %2261 = vmatmul.mubr.bf16.gmra.mxu0 %v2174
        %v2262 = vpop.f32.mrf.mxu0
        %v2263 = vadd.f32 0.0, %v2262
        %v2264 = vpop.f32.mrf.mxu0
        %v2265 = vpop.f32.mrf.mxu0
        %v2266 = vadd.f32 0.0, %v2265
        %v2267 = vpop.f32.mrf.mxu0
        %2268 = vmatprep.mubr.bf16.mxu0 0
        %2269 = vmatmul.mubr.bf16.gmra.mxu0 %v2176
        %v2270 = vpop.f32.mrf.mxu0
        %v2271 = vadd.f32 0.0, %v2270
        %v2272 = vpop.f32.mrf.mxu0
        %v2273 = vpop.f32.mrf.mxu0
        %v2274 = vadd.f32 0.0, %v2273
        %v2275 = vpop.f32.mrf.mxu0
        %2276 = vmatprep.mubr.bf16.mxu0 0
        %2277 = vmatmul.mubr.bf16.gmra.mxu0 %v2178
        %v2278 = vpop.f32.mrf.mxu0
        %v2279 = vadd.f32 0.0, %v2278
        %v2280 = vpop.f32.mrf.mxu0
        %v2281 = vpop.f32.mrf.mxu0
        %v2282 = vadd.f32 0.0, %v2281
        %v2283 = vpop.f32.mrf.mxu0
        %2284 = vmatprep.mubr.bf16.mxu0 0
        %2285 = vmatmul.mubr.bf16.gmra.mxu0 %v2180
        %v2286 = vpop.f32.mrf.mxu0
        %v2287 = vadd.f32 0.0, %v2286
        %v2288 = vpop.f32.mrf.mxu0
        %v2289 = vpop.f32.mrf.mxu0
        %v2290 = vadd.f32 0.0, %v2289
        %v2291 = vpop.f32.mrf.mxu0
        %2292 = vmatprep.mubr.bf16.mxu0 0
        %2293 = vmatmul.mubr.bf16.gmra.mxu0 %v2182
        %v2294 = vpop.f32.mrf.mxu0
        %v2295 = vadd.f32 0.0, %v2294
        %v2296 = vpop.f32.mrf.mxu0
        %v2297 = vpop.f32.mrf.mxu0
        %v2298 = vadd.f32 0.0, %v2297
        %v2299 = vpop.f32.mrf.mxu0
        %2300 = vmatprep.mubr.bf16.mxu0 0
        %2301 = vmatmul.mubr.bf16.gmra.mxu0 %v2184
        %v2302 = vpop.f32.mrf.mxu0
        %v2303 = vadd.f32 0.0, %v2302
        %v2304 = vpop.f32.mrf.mxu0
        %v2305 = vpop.f32.mrf.mxu0
        %v2306 = vadd.f32 0.0, %v2305
        %v2307 = vpop.f32.mrf.mxu0
        %2308 = vmatprep.mubr.bf16.mxu0 0
        %2309 = vmatmul.mubr.bf16.gmra.mxu0 %v2186
        %v2310 = vpop.f32.mrf.mxu0
        %v2311 = vadd.f32 0.0, %v2310
        %v2312 = vpop.f32.mrf.mxu0
        %v2313 = vpop.f32.mrf.mxu0
        %v2314 = vadd.f32 0.0, %v2313
        %v2315 = vpop.f32.mrf.mxu0
        %2316 = vmatprep.mubr.bf16.mxu0 0
        %2317 = vmatmul.mubr.bf16.gmra.mxu0 %v2188
        %v2318 = vpop.f32.mrf.mxu0
        %v2319 = vadd.f32 0.0, %v2318
        %v2320 = vpop.f32.mrf.mxu0
        %v2321 = vpop.f32.mrf.mxu0
        %v2322 = vadd.f32 0.0, %v2321
        %v2323 = vpop.f32.mrf.mxu0
        %2324 = vmatprep.mubr.bf16.mxu0 0
        %2325 = vmatmul.mubr.bf16.gmra.mxu0 %v2190
        %v2326 = vpop.f32.mrf.mxu0
        %v2327 = vadd.f32 0.0, %v2326
        %v2328 = vpop.f32.mrf.mxu0
        %v2329 = vpop.f32.mrf.mxu0
        %v2330 = vadd.f32 0.0, %v2329
        %v2331 = vpop.f32.mrf.mxu0
        %2332 = vmatprep.mubr.bf16.mxu0 0
        %2333 = vmatmul.mubr.bf16.gmra.mxu0 %v2192
        %v2334 = vpop.f32.mrf.mxu0
        %v2335 = vadd.f32 0.0, %v2334
        %v2336 = vpop.f32.mrf.mxu0
        %v2337 = vpop.f32.mrf.mxu0
        %v2338 = vadd.f32 0.0, %v2337
        %v2339 = vpop.f32.mrf.mxu0
        %2340 = vmatprep.mubr.bf16.mxu0 0
        %2341 = vmatmul.mubr.bf16.gmra.mxu0 %v2194
        %v2342 = vpop.f32.mrf.mxu0
        %v2343 = vadd.f32 0.0, %v2342
        %v2344 = vpop.f32.mrf.mxu0
        %v2345 = vpop.f32.mrf.mxu0
        %v2346 = vadd.f32 0.0, %v2345
        %v2347 = vpop.f32.mrf.mxu0
        %2348 = vmatprep.mubr.bf16.mxu0 0
        %2349 = vmatmul.mubr.bf16.gmra.mxu0 %v2196
        %v2350 = vpop.f32.mrf.mxu0
        %v2351 = vadd.f32 0.0, %v2350
        %v2352 = vpop.f32.mrf.mxu0
        %v2353 = vpop.f32.mrf.mxu0
        %v2354 = vadd.f32 0.0, %v2353
        %v2355 = vpop.f32.mrf.mxu0
        %2356 = vmatprep.mubr.bf16.mxu0 0
        %2357 = vmatmul.mubr.bf16.gmra.mxu0 %v2198
        %v2358 = vpop.f32.mrf.mxu0
        %v2359 = vadd.f32 0.0, %v2358
        %v2360 = vpop.f32.mrf.mxu0
        %v2361 = vpop.f32.mrf.mxu0
        %v2362 = vadd.f32 0.0, %v2361
        %v2363 = vpop.f32.mrf.mxu0
        %2364 = vdwg.mxu0
        %2365 = vst.msk [vmem:[%s181] sm:$0xff] %vm1916, %v2239
        %2366 = vst.msk [vmem:[%s181 + $0x8] sm:$0xff] %vm1916, %v2242
        %2367 = vst.msk [vmem:[%s181 + $0x10] sm:$0xff] %vm1916, %v2247
        %2368 = vst.msk [vmem:[%s181 + $0x18] sm:$0xff] %vm1916, %v2250
        %2369 = vst.msk [vmem:[%s181 + $0x20] sm:$0xff] %vm1916, %v2255
        %2370 = vst.msk [vmem:[%s181 + $0x28] sm:$0xff] %vm1916, %v2258
        %2371 = vst.msk [vmem:[%s181 + $0x30] sm:$0xff] %vm1916, %v2263
        %2372 = vst.msk [vmem:[%s181 + $0x38] sm:$0xff] %vm1916, %v2266
        %2373 = vst.msk [vmem:[%s181 + $0x40] sm:$0xff] %vm1916, %v2271
        %2374 = vst.msk [vmem:[%s181 + $0x48] sm:$0xff] %vm1916, %v2274
        %2375 = vst.msk [vmem:[%s181 + $0x50] sm:$0xff] %vm1916, %v2279
        %2376 = vst.msk [vmem:[%s181 + $0x58] sm:$0xff] %vm1916, %v2282
        %2377 = vst.msk [vmem:[%s181 + $0x60] sm:$0xff] %vm1916, %v2287
        %2378 = vst.msk [vmem:[%s181 + $0x68] sm:$0xff] %vm1916, %v2290
        %2379 = vst.msk [vmem:[%s181 + $0x70] sm:$0xff] %vm1916, %v2295
        %2380 = vst.msk [vmem:[%s181 + $0x78] sm:$0xff] %vm1916, %v2298
        %2381 = vst.msk [vmem:[%s181 + $0x80] sm:$0xff] %vm1916, %v2303
        %2382 = vst.msk [vmem:[%s181 + $0x88] sm:$0xff] %vm1916, %v2306
        %2383 = vst.msk [vmem:[%s181 + $0x90] sm:$0xff] %vm1916, %v2311
        %2384 = vst.msk [vmem:[%s181 + $0x98] sm:$0xff] %vm1916, %v2314
        %2385 = vst.msk [vmem:[%s181 + $0xa0] sm:$0xff] %vm1916, %v2319
        %2386 = vst.msk [vmem:[%s181 + $0xa8] sm:$0xff] %vm1916, %v2322
        %2387 = vst.msk [vmem:[%s181 + $0xb0] sm:$0xff] %vm1916, %v2327
        %2388 = vst.msk [vmem:[%s181 + $0xb8] sm:$0xff] %vm1916, %v2330
        %2389 = vst.msk [vmem:[%s181 + $0xc0] sm:$0xff] %vm1916, %v2335
        %2390 = vst.msk [vmem:[%s181 + $0xc8] sm:$0xff] %vm1916, %v2338
        %2391 = vst.msk [vmem:[%s181 + $0xd0] sm:$0xff] %vm1916, %v2343
        %2392 = vst.msk [vmem:[%s181 + $0xd8] sm:$0xff] %vm1916, %v2346
        %2393 = vst.msk [vmem:[%s181 + $0xe0] sm:$0xff] %vm1916, %v2351
        %2394 = vst.msk [vmem:[%s181 + $0xe8] sm:$0xff] %vm1916, %v2354
        %2395 = vst.msk [vmem:[%s181 + $0xf0] sm:$0xff] %vm1916, %v2359
        %2396 = vst.msk [vmem:[%s181 + $0xf8] sm:$0xff] %vm1916, %v2362
        %v2397 = vadd.f32 %v2239, %v2242
        %v2398 = vadd.f32 %v2397, %v2247
        %v2399 = vadd.f32 %v2398, %v2250
        %v2400 = vadd.f32 %v2399, %v2255
        %v2401 = vadd.f32 %v2400, %v2258
        %v2402 = vadd.f32 %v2401, %v2263
        %v2403 = vadd.f32 %v2402, %v2266
        %v2404 = vadd.f32 %v2403, %v2271
        %v2405 = vadd.f32 %v2404, %v2274
        %v2406 = vadd.f32 %v2405, %v2279
        %v2407 = vadd.f32 %v2406, %v2282
        %v2408 = vadd.f32 %v2407, %v2287
        %v2409 = vadd.f32 %v2408, %v2290
        %v2410 = vadd.f32 %v2409, %v2295
        %v2411 = vadd.f32 %v2410, %v2298
        %v2412 = vadd.f32 %v2411, %v2303
        %v2413 = vadd.f32 %v2412, %v2306
        %v2414 = vadd.f32 %v2413, %v2311
        %v2415 = vadd.f32 %v2414, %v2314
        %v2416 = vadd.f32 %v2415, %v2319
        %v2417 = vadd.f32 %v2416, %v2322
        %v2418 = vadd.f32 %v2417, %v2327
        %v2419 = vadd.f32 %v2418, %v2330
        %v2420 = vadd.f32 %v2419, %v2335
        %v2421 = vadd.f32 %v2420, %v2338
        %v2422 = vadd.f32 %v2421, %v2343
        %v2423 = vadd.f32 %v2422, %v2346
        %v2424 = vadd.f32 %v2423, %v2351
        %v2425 = vadd.f32 %v2424, %v2354
        %v2426 = vadd.f32 %v2425, %v2359
        %v2427 = vadd.f32 %v2426, %v2362
        %v2428 = vrot.slane %v2427, 4
        %v2429 = vadd.f32 %v2427, %v2428
        %v2430 = vrot.slane %v2429, 2
        %v2431 = vadd.f32 %v2429, %v2430
        %v2432 = vrot.slane %v2431, 1
        %v2433 = vadd.f32 %v2431, %v2432
        %v2434 = vmul.f32 %v2433, 0.00390625
        %v2435 = vsub.f32 %v2239, %v2434
        %v2436 = vsub.f32 %v2242, %v2434
        %v2437 = vsub.f32 %v2247, %v2434
        %v2438 = vsub.f32 %v2250, %v2434
        %v2439 = vsub.f32 %v2255, %v2434
        %v2440 = vsub.f32 %v2258, %v2434
        %v2441 = vsub.f32 %v2263, %v2434
        %v2442 = vsub.f32 %v2266, %v2434
        %v2443 = vsub.f32 %v2271, %v2434
        %v2444 = vsub.f32 %v2274, %v2434
        %v2445 = vsub.f32 %v2279, %v2434
        %v2446 = vsub.f32 %v2282, %v2434
        %v2447 = vsub.f32 %v2287, %v2434
        %v2448 = vsub.f32 %v2290, %v2434
        %v2449 = vsub.f32 %v2295, %v2434
        %v2450 = vsub.f32 %v2298, %v2434
        %v2451 = vsub.f32 %v2303, %v2434
        %v2452 = vsub.f32 %v2306, %v2434
        %v2453 = vsub.f32 %v2311, %v2434
        %v2454 = vsub.f32 %v2314, %v2434
        %v2455 = vsub.f32 %v2319, %v2434
        %v2456 = vsub.f32 %v2322, %v2434
        %v2457 = vsub.f32 %v2327, %v2434
        %v2458 = vsub.f32 %v2330, %v2434
        %v2459 = vsub.f32 %v2335, %v2434
        %v2460 = vsub.f32 %v2338, %v2434
        %v2461 = vsub.f32 %v2343, %v2434
        %v2462 = vsub.f32 %v2346, %v2434
        %v2463 = vsub.f32 %v2351, %v2434
        %v2464 = vsub.f32 %v2354, %v2434
        %v2465 = vsub.f32 %v2359, %v2434
        %v2466 = vsub.f32 %v2362, %v2434
        %v2467 = vmul.f32 %v2435, %v2435
        %v2468 = vmul.f32 %v2436, %v2436
        %v2469 = vmul.f32 %v2437, %v2437
        %v2470 = vmul.f32 %v2438, %v2438
        %v2471 = vmul.f32 %v2439, %v2439
        %v2472 = vmul.f32 %v2440, %v2440
        %v2473 = vmul.f32 %v2441, %v2441
        %v2474 = vmul.f32 %v2442, %v2442
        %v2475 = vmul.f32 %v2443, %v2443
        %v2476 = vmul.f32 %v2444, %v2444
        %v2477 = vmul.f32 %v2445, %v2445
        %v2478 = vmul.f32 %v2446, %v2446
        %v2479 = vmul.f32 %v2447, %v2447
        %v2480 = vmul.f32 %v2448, %v2448
        %v2481 = vmul.f32 %v2449, %v2449
        %v2482 = vmul.f32 %v2450, %v2450
        %v2483 = vmul.f32 %v2451, %v2451
        %v2484 = vmul.f32 %v2452, %v2452
        %v2485 = vmul.f32 %v2453, %v2453
        %v2486 = vmul.f32 %v2454, %v2454
        %v2487 = vmul.f32 %v2455, %v2455
        %v2488 = vmul.f32 %v2456, %v2456
        %v2489 = vmul.f32 %v2457, %v2457
        %v2490 = vmul.f32 %v2458, %v2458
        %v2491 = vmul.f32 %v2459, %v2459
        %v2492 = vmul.f32 %v2460, %v2460
        %v2493 = vmul.f32 %v2461, %v2461
        %v2494 = vmul.f32 %v2462, %v2462
        %v2495 = vmul.f32 %v2463, %v2463
        %v2496 = vmul.f32 %v2464, %v2464
        %v2497 = vmul.f32 %v2465, %v2465
        %v2498 = vmul.f32 %v2466, %v2466
        %v2499 = vadd.f32 %v2467, %v2468
        %v2500 = vadd.f32 %v2499, %v2469
        %v2501 = vadd.f32 %v2500, %v2470
        %v2502 = vadd.f32 %v2501, %v2471
        %v2503 = vadd.f32 %v2502, %v2472
        %v2504 = vadd.f32 %v2503, %v2473
        %v2505 = vadd.f32 %v2504, %v2474
        %v2506 = vadd.f32 %v2505, %v2475
        %v2507 = vadd.f32 %v2506, %v2476
        %v2508 = vadd.f32 %v2507, %v2477
        %v2509 = vadd.f32 %v2508, %v2478
        %v2510 = vadd.f32 %v2509, %v2479
        %v2511 = vadd.f32 %v2510, %v2480
        %v2512 = vadd.f32 %v2511, %v2481
        %v2513 = vadd.f32 %v2512, %v2482
        %v2514 = vadd.f32 %v2513, %v2483
        %v2515 = vadd.f32 %v2514, %v2484
        %v2516 = vadd.f32 %v2515, %v2485
        %v2517 = vadd.f32 %v2516, %v2486
        %v2518 = vadd.f32 %v2517, %v2487
        %v2519 = vadd.f32 %v2518, %v2488
        %v2520 = vadd.f32 %v2519, %v2489
        %v2521 = vadd.f32 %v2520, %v2490
        %v2522 = vadd.f32 %v2521, %v2491
        %v2523 = vadd.f32 %v2522, %v2492
        %v2524 = vadd.f32 %v2523, %v2493
        %v2525 = vadd.f32 %v2524, %v2494
        %v2526 = vadd.f32 %v2525, %v2495
        %v2527 = vadd.f32 %v2526, %v2496
        %v2528 = vadd.f32 %v2527, %v2497
        %v2529 = vadd.f32 %v2528, %v2498
        %v2530 = vrot.slane %v2529, 4
        %v2531 = vadd.f32 %v2529, %v2530
        %v2532 = vrot.slane %v2531, 2
        %v2533 = vadd.f32 %v2531, %v2532
        %v2534 = vrot.slane %v2533, 1
        %v2535 = vadd.f32 %v2533, %v2534
        %vm2536 = vcmask 1040384
        %v2537 = vsel %vm2536, %v2434, %v2535
        %vm2538 = vcmask 58368
        %2539 = vst.msk [vmem:[%s171] sm:$0x3] %vm2538, %v2537
        %p2540 = scmp.lt.s32.totalorder %s18, 1
        %s2541 = scalar_select %p2540, %s18, 1
        %s2542 = smul.addr %s2541, 32
        %s2543 = smul.addr %s2542, 8
        %s2544 = scalar_lea.vmem %s2, %s2543
        %s2545 = sand.u32 %s99, 1
        %s2546 = scalar_lea.sflag [#allocation3], %s2545
        %s2547 = sand.u32 %s99, 1
        %s2548 = smul.addr %s2547, 2
        %s2549 = scalar_lea.vmem [#allocation2], %s2548
        // Predicated region
        $region29: #{tpu_custom_call.1} parent=27 // pred_check
          %p2550 = pneg %p83
        $region30: #{tpu_custom_call.1} parent=27 // pred_check_branch
          %2552 = sbr.rel (%p2550) target = $region32
        $region31: #{tpu_custom_call.1} parent=27 // pred_region
          _
        $region32: #{tpu_custom_call.1} parent=27 // pred_fallthru
          _
        // Predicated region
        $region33: #{tpu_custom_call.1} parent=27 // pred_check
          %p2553 = pneg %p109
        $region34: #{tpu_custom_call.1} parent=27 // pred_check_branch
          %2555 = sbr.rel (%p2553) target = $region36
        $region35: #{tpu_custom_call.1} parent=27 // pred_region
          %s2557 = ssub.s32 32, 32
          %2558 = vsyncadd %s2546, %s2557
          %s2559 = smul.addr %s18, 32
          %s2560 = scalar_lea.hbm %s3, %s2559
          %s2562 = sshll.u32 %s2549, 4
          %s2563 = int_to_ptr.vmem [resolvable:$true] %s2562
          %2565 = dma.vmem_to_hbm [thread:$0]  %s2563, 32, %s2560, %s2546
        $region36: #{tpu_custom_call.1} parent=27 // pred_fallthru
          _
      $region28: #{tpu_custom_call.1} parent=5 // pred_fallthru
        _
      %p2566 = scmp.le.s32.totalorder 2, %s13
      // Predicated region
      $region37: #{tpu_custom_call.1} parent=5 // pred_check
        %p2567 = pneg %p2566
      $region38: #{tpu_custom_call.1} parent=5 // pred_check_branch
        %2569 = sbr.rel (%p2567) target = $region40
      $region39: #{tpu_custom_call.1} parent=5 // pred_region
        %s2570 = ssub.s32 %s13, 2
        // Predicated region
        $region41: #{tpu_custom_call.1} parent=39 // pred_check
          %p2571 = pneg %p89
        $region42: #{tpu_custom_call.1} parent=39 // pred_check_branch
          %2573 = sbr.rel (%p2571) target = $region44
        $region43: #{tpu_custom_call.1} parent=39 // pred_region
          %p2574 = scmp.lt.s32.totalorder %s19, 1
          %s2575 = scalar_select %p2574, %s19, 1
          %s2576 = smul.addr %s2575, 32
          %s2577 = smul.addr %s2576, 8
          %s2578 = scalar_lea.vmem %s2, %s2577
        $region44: #{tpu_custom_call.1} parent=39 // pred_fallthru
          _
        // Predicated region
        $region45: #{tpu_custom_call.1} parent=39 // pred_check
          %p2579 = pneg %p115
        $region46: #{tpu_custom_call.1} parent=39 // pred_check_branch
          %2581 = sbr.rel (%p2579) target = $region48
        $region47: #{tpu_custom_call.1} parent=39 // pred_region
          %s2582 = sand.u32 %s100, 1
          %s2583 = scalar_lea.sflag [#allocation3], %s2582
          %s2584 = sand.u32 %s100, 1
          %s2585 = smul.addr %s2584, 2
          %s2586 = scalar_lea.vmem [#allocation2], %s2585
          %2587 = dma.done %s2583, 32
        $region48: #{tpu_custom_call.1} parent=39 // pred_fallthru
          _
      $region40: #{tpu_custom_call.1} parent=5 // pred_fallthru
        _
    $region6: #{tpu_custom_call.1} parent=1 // loop_footer
      %s17 = sadd.s32 1, %s13
    $region7: #{tpu_custom_call.1} parent=1 // loop_footer_branch
      %12 = sbr.rel target = $region3
    $region8: #{tpu_custom_call.1} parent=1 // loop_exit
      _
    %2588 = vsyncpa [#allocation3], 1
    %s2589 = scalar_lea.sflag [#allocation3], 1
    %2590 = vsyncpa %s2589, 1

</llo_original>
